<compile_context>
chip_gen: v6e
topology: v6e:2x2x1
jax: 0.10.0
libtpu: 0.0.40
codegen_flags: <defaults>
</compile_context>

<pallas_src>
import functools

import jax
import jax.numpy as jnp
from jax.experimental import pallas as pl
from jax.experimental.pallas import tpu as pltpu


def _local_disc_kernel(x_ref, w0_ref, b0_ref, w1_ref, b1_ref, w2_ref, b2_ref,
                       o_ref, *, compute_dtype):
    # Weights / biases: VMEM-resident (constant index_maps, single-buffered).
    w0 = w0_ref[...]            # (hidden, C)       compute_dtype
    b0 = b0_ref[...]            # (hidden, 1)       f32
    w1 = w1_ref[...]            # (hidden, hidden)  compute_dtype
    b1 = b1_ref[...]            # (hidden, 1)       f32
    w2 = w2_ref[...]            # (1, hidden)       compute_dtype
    b2 = b2_ref[...]            # (1, 1)            f32

    x = x_ref[...].astype(compute_dtype)              # (C, thw): pixels on lanes

    # Stage 0: (hidden, C) @ (C, thw) on the MXU, f32 accumulation.
    h = jnp.dot(w0, x, preferred_element_type=jnp.float32) + b0
    h = jnp.maximum(h, 0.0).astype(compute_dtype)

    # Stage 1: (hidden, hidden) @ (hidden, thw) -- the dominant matmul.
    h = jnp.dot(w1, h, preferred_element_type=jnp.float32) + b1
    h = jnp.maximum(h, 0.0).astype(compute_dtype)

    # Stage 2 (hidden -> 1): (1, hidden) @ (hidden, thw) on the MXU (which has
    # slack once stages 0/1 run in bf16).  Produces a lane-dense (1, thw) row.
    out = jnp.dot(w2, h, preferred_element_type=jnp.float32) + b2
    o_ref[...] = out.astype(o_ref.dtype)


def local_discriminator_forward(x_nchw, params, *, thw=2048,
                                compute_dtype=jnp.bfloat16):
    """x_nchw: (N, C, H, W) float32.  Returns (N, 1, H, W) float32.

    compute_dtype: MXU operand dtype.  bf16 (default) runs the matmuls at the
    native MXU rate with f32 accumulation (biases/ReLU/output stay f32);
    expect ~1e-2 relative error vs. the f32 module.  Pass jnp.float32 for
    bit-exact (up to fp reassociation) module semantics.
    """
    w0, b0, w1, b1, w2, b2 = params
    N, C, H, W = x_nchw.shape
    hidden = w0.shape[0]
    assert w0.shape == (hidden, C) and w1.shape == (hidden, hidden)
    assert w2.shape == (hidden, 1) and b2.shape == (1, 1)

    HW = H * W
    # Free reshape: NCHW is already channel-major; no transpose / extra HBM pass.
    x3 = x_nchw.reshape(N, C, HW)

    # ---- lane-tile selection ------------------------------------------------
    thw_req = max(256, (int(thw) // 256) * 256)     # multiple of the MXU width
    if HW > thw_req:
        thw_t = thw_req                  # wide lane tile; last tile is masked
    elif N == 1 and HW > 128:
        # Single image with small spatial extent: split the pixel axis into two
        # 128-aligned tiles so both v7x TensorCores get a grid step.
        thw_t = pl.cdiv(pl.cdiv(HW, 2), 128) * 128
    else:
        thw_t = HW                       # full extent (exempt from the 128 rule)
        # NOTE: if HW < 128 the output store is lane-masked -- correct but slow.

    grid = (N, pl.cdiv(HW, thw_t))

    # MXU operands in compute_dtype; biases stay f32.
    w0c = w0.astype(compute_dtype)
    w1c = w1.astype(compute_dtype)
    w2c = w2.reshape(1, hidden).astype(compute_dtype)

    kernel = functools.partial(_local_disc_kernel, compute_dtype=compute_dtype)
    # Weights never change across the grid: single buffer (no wasted VMEM).
    resident = pl.Buffered(1)

    out = pl.pallas_call(
        kernel,
        out_shape=jax.ShapeDtypeStruct((N, 1, HW), jnp.float32),
        grid_spec=pltpu.PrefetchScalarGridSpec(
            num_scalar_prefetch=0,
            grid=grid,
            in_specs=[
                # x tile: batch dim squeezed, channels on sublanes, pixels on lanes.
                pl.BlockSpec((None, C, thw_t), lambda n, j: (n, 0, j)),
                pl.BlockSpec((hidden, C), lambda n, j: (0, 0),
                             pipeline_mode=resident),                 # w0
                pl.BlockSpec((hidden, 1), lambda n, j: (0, 0),
                             pipeline_mode=resident),                 # b0
                pl.BlockSpec((hidden, hidden), lambda n, j: (0, 0),
                             pipeline_mode=resident),                 # w1
                pl.BlockSpec((hidden, 1), lambda n, j: (0, 0),
                             pipeline_mode=resident),                 # b1
                pl.BlockSpec((1, hidden), lambda n, j: (0, 0),
                             pipeline_mode=resident),                 # w2 row
                pl.BlockSpec((1, 1), lambda n, j: (0, 0),
                             pipeline_mode=resident),                 # b2
            ],
            out_specs=pl.BlockSpec((None, 1, thw_t), lambda n, j: (n, 0, j)),
        ),
        compiler_params=pltpu.CompilerParams(
            dimension_semantics=("parallel", "parallel"),
            # Working set at thw=2048 f32 is ~6-8 MB (weights + double-buffered
            # x tile + (256, thw) intermediates); 32 MiB is explicit and safe
            # on v5e (16 MiB default scoped), v6e, and v7x (64 MiB physical).
            vmem_limit_bytes=32 * 1024 * 1024,
        ),
    )(x3, w0c, b0, w1c, b1, w2c, b2)

    return out.reshape(N, 1, H, W)


def init_params(key, input_channels, hidden=256, out_ch=1):
    """Deterministic init mimicking PyTorch Conv2d default (uniform fan-in).

    Weights are stored as (out_channels, in_channels) except w2 which is kept
    as a (hidden, 1) column; biases are (out_channels, 1) columns.
    """
    assert out_ch == 1, "final stage assumes a single output channel"
    k0, k1, k2, k3, k4, k5 = jax.random.split(key, 6)

    def u(k, shape, fan_in):
        bound = 1.0 / jnp.sqrt(fan_in)
        return jax.random.uniform(k, shape, jnp.float32, -bound, bound)

    w0 = u(k0, (hidden, input_channels), input_channels)
    b0 = u(k1, (hidden, 1), input_channels)
    w1 = u(k2, (hidden, hidden), hidden)
    b1 = u(k3, (hidden, 1), hidden)
    w2 = u(k4, (hidden, out_ch), hidden)      # (256, 1) column
    b2 = u(k5, (out_ch, 1), hidden)           # (1, 1)
    return (w0, b0, w1, b1, w2, b2)


def _reference_forward(x_nchw, params):
    """Pure-JAX f32 reference of the PyTorch module."""
    w0, b0, w1, b1, w2, b2 = params
    N, C, H, W = x_nchw.shape
    xf = jnp.transpose(x_nchw, (0, 2, 3, 1)).reshape(-1, C)     # (M, C)
    h = jnp.maximum(xf @ w0.T + b0[:, 0], 0.0)
    h = jnp.maximum(h @ w1.T + b1[:, 0], 0.0)
    o = h @ w2 + b2[0]                                          # (M, 1)
    return jnp.transpose(o.reshape(N, H, W, 1), (0, 3, 1, 2))


if __name__ == "__main__":
    key = jax.random.PRNGKey(0)
    kx, kp = jax.random.split(key)

    # Shapes consistent with the module: batch=2, channels=82, 16x16 spatial.
    N, C, H, W = 2, 82, 16, 16
    x = jax.random.normal(kx, (N, C, H, W), jnp.float32)
    params = init_params(kp, input_channels=C)

    ref = jax.block_until_ready(_reference_forward(x, params))

    # Default path: bf16 MXU operands, f32 accumulation (discriminator-grade
    # accuracy; documented tolerance below).
    out = jax.block_until_ready(local_discriminator_forward(x, params))
    assert out.shape == (N, 1, H, W), out.shape
    assert jnp.allclose(out, ref, atol=1e-1, rtol=5e-2), \
        float(jnp.max(jnp.abs(out - ref)))

    # Exact f32 path: bit-for-bit the module's semantics (up to fp reassoc).
    out_f32 = jax.block_until_ready(
        local_discriminator_forward(x, params, compute_dtype=jnp.float32))
    assert jnp.allclose(out_f32, ref, atol=1e-4, rtol=1e-4), \
        float(jnp.max(jnp.abs(out_f32 - ref)))

    # Single image with small H*W: exercises the v7x two-tile pixel split and
    # a masked partial lane tile (144 pixels -> tiles of 128 + 16).
    x1 = jax.random.normal(jax.random.PRNGKey(1), (1, C, 12, 12), jnp.float32)
    ref1 = _reference_forward(x1, params)
    out1 = jax.block_until_ready(
        local_discriminator_forward(x1, params, compute_dtype=jnp.float32))
    assert out1.shape == (1, 1, 12, 12), out1.shape
    assert jnp.allclose(out1, ref1, atol=1e-4, rtol=1e-4), \
        float(jnp.max(jnp.abs(out1 - ref1)))

    print("KERNEL_OK")
</pallas_src>

<mosaic_0001>
module attributes {stable_mosaic.version = 11 : i64} {
  func.func @_local_disc_kernel(%arg0: i32, %arg1: i32, %arg2: memref<1x82x256xf32, #tpu.memory_space<vmem>>, %arg3: memref<256x82xbf16, #tpu.memory_space<vmem>>, %arg4: memref<256x1xf32, #tpu.memory_space<vmem>>, %arg5: memref<256x256xbf16, #tpu.memory_space<vmem>>, %arg6: memref<256x1xf32, #tpu.memory_space<vmem>>, %arg7: memref<1x256xbf16, #tpu.memory_space<vmem>>, %arg8: memref<1x1xf32, #tpu.memory_space<vmem>>, %arg9: memref<1x1x256xf32, #tpu.memory_space<vmem>>) attributes {dimension_semantics = [#tpu.dimension_semantics<parallel>, #tpu.dimension_semantics<parallel>], iteration_bounds = array<i64: 2, 1>, scalar_prefetch = 0 : i64, scratch_operands = 0 : i64, tpu.core_type = #tpu.core_type<tc>, window_params = [{transform_indices = @transform_0, window_bounds = array<i64: 1, 82, 256>}, {pipeline_mode = #tpu.pipeline_mode<synchronous>, transform_indices = @transform_1, window_bounds = array<i64: 256, 82>}, {pipeline_mode = #tpu.pipeline_mode<synchronous>, transform_indices = @transform_2, window_bounds = array<i64: 256, 1>}, {pipeline_mode = #tpu.pipeline_mode<synchronous>, transform_indices = @transform_3, window_bounds = array<i64: 256, 256>}, {pipeline_mode = #tpu.pipeline_mode<synchronous>, transform_indices = @transform_4, window_bounds = array<i64: 256, 1>}, {pipeline_mode = #tpu.pipeline_mode<synchronous>, transform_indices = @transform_5, window_bounds = array<i64: 1, 256>}, {pipeline_mode = #tpu.pipeline_mode<synchronous>, transform_indices = @transform_6, window_bounds = array<i64: 1, 1>}, {transform_indices = @transform_7, window_bounds = array<i64: 1, 1, 256>}]} {
    %c0 = arith.constant 0 : index
    %c0_0 = arith.constant 0 : index
    %0 = vector.load %arg3[%c0, %c0_0] : memref<256x82xbf16, #tpu.memory_space<vmem>>, vector<256x82xbf16>
    %c0_1 = arith.constant 0 : index
    %c0_2 = arith.constant 0 : index
    %1 = vector.load %arg4[%c0_1, %c0_2] : memref<256x1xf32, #tpu.memory_space<vmem>>, vector<256x1xf32>
    %c0_3 = arith.constant 0 : index
    %c0_4 = arith.constant 0 : index
    %2 = vector.load %arg5[%c0_3, %c0_4] : memref<256x256xbf16, #tpu.memory_space<vmem>>, vector<256x256xbf16>
    %c0_5 = arith.constant 0 : index
    %c0_6 = arith.constant 0 : index
    %3 = vector.load %arg6[%c0_5, %c0_6] : memref<256x1xf32, #tpu.memory_space<vmem>>, vector<256x1xf32>
    %c0_7 = arith.constant 0 : index
    %c0_8 = arith.constant 0 : index
    %4 = vector.load %arg7[%c0_7, %c0_8] : memref<1x256xbf16, #tpu.memory_space<vmem>>, vector<1x256xbf16>
    %c0_9 = arith.constant 0 : index
    %c0_10 = arith.constant 0 : index
    %5 = vector.load %arg8[%c0_9, %c0_10] : memref<1x1xf32, #tpu.memory_space<vmem>>, vector<1x1xf32>
    %c0_11 = arith.constant 0 : index
    %c0_12 = arith.constant 0 : index
    %c0_13 = arith.constant 0 : index
    %6 = vector.load %arg2[%c0_11, %c0_12, %c0_13] : memref<1x82x256xf32, #tpu.memory_space<vmem>>, vector<1x82x256xf32>
    %7 = vector.shape_cast %6 : vector<1x82x256xf32> to vector<82x256xf32>
    %8 = arith.truncf %7 : vector<82x256xf32> to vector<82x256xbf16>
    %cst = arith.constant dense<0.000000e+00> : vector<256x256xf32>
    %9 = tpu.matmul %0, %8, %cst {dimension_numbers = #tpu.dot_dimension_numbers<[1], [0], [0], [1], [0, 0, 1, 1], [], []>} : vector<256x82xbf16>, vector<82x256xbf16>, vector<256x256xf32> -> vector<256x256xf32>
    %10 = vector.broadcast %1 : vector<256x1xf32> to vector<256x256xf32>
    %11 = arith.addf %9, %10 : vector<256x256xf32>
    %cst_14 = arith.constant 0.000000e+00 : f32
    %12 = vector.broadcast %cst_14 : f32 to vector<256x256xf32>
    %13 = arith.maximumf %11, %12 : vector<256x256xf32>
    %14 = arith.truncf %13 : vector<256x256xf32> to vector<256x256xbf16>
    %cst_15 = arith.constant dense<0.000000e+00> : vector<256x256xf32>
    %15 = tpu.matmul %2, %14, %cst_15 {dimension_numbers = #tpu.dot_dimension_numbers<[1], [0], [0], [1], [0, 0, 1, 1], [], []>} : vector<256x256xbf16>, vector<256x256xbf16>, vector<256x256xf32> -> vector<256x256xf32>
    %16 = vector.broadcast %3 : vector<256x1xf32> to vector<256x256xf32>
    %17 = arith.addf %15, %16 : vector<256x256xf32>
    %cst_16 = arith.constant 0.000000e+00 : f32
    %18 = vector.broadcast %cst_16 : f32 to vector<256x256xf32>
    %19 = arith.maximumf %17, %18 : vector<256x256xf32>
    %20 = arith.truncf %19 : vector<256x256xf32> to vector<256x256xbf16>
    %cst_17 = arith.constant dense<0.000000e+00> : vector<1x256xf32>
    %21 = tpu.matmul %4, %20, %cst_17 {dimension_numbers = #tpu.dot_dimension_numbers<[1], [0], [0], [1], [0, 0, 1, 1], [], []>} : vector<1x256xbf16>, vector<256x256xbf16>, vector<1x256xf32> -> vector<1x256xf32>
    %22 = vector.broadcast %5 : vector<1x1xf32> to vector<1x256xf32>
    %23 = arith.addf %21, %22 : vector<1x256xf32>
    %c0_18 = arith.constant 0 : index
    %c0_19 = arith.constant 0 : index
    %c0_20 = arith.constant 0 : index
    %24 = vector.load %arg9[%c0_18, %c0_19, %c0_20] : memref<1x1x256xf32, #tpu.memory_space<vmem>>, vector<1x1x256xf32>
    %25 = vector.shape_cast %24 : vector<1x1x256xf32> to vector<1x256xf32>
    %26 = vector.shape_cast %23 : vector<1x256xf32> to vector<1x1x256xf32>
    tpu.vector_store %arg9[%c0_18, %c0_19, %c0_20], %26 {strides = array<i32>} : memref<1x1x256xf32, #tpu.memory_space<vmem>>, vector<1x1x256xf32>,
    return
  }
  func.func @transform_0(%arg0: i32, %arg1: i32) -> (i32, i32, i32) {
    %c0_i32 = arith.constant 0 : i32
    %c0_i32_0 = arith.constant 0 : i32
    return %arg0, %c0_i32, %arg1 : i32, i32, i32
  }
  func.func @transform_1(%arg0: i32, %arg1: i32) -> (i32, i32) {
    %c0_i32 = arith.constant 0 : i32
    %c0_i32_0 = arith.constant 0 : i32
    %c0_i32_1 = arith.constant 0 : i32
    return %c0_i32, %c0_i32_0 : i32, i32
  }
  func.func @transform_2(%arg0: i32, %arg1: i32) -> (i32, i32) {
    %c0_i32 = arith.constant 0 : i32
    %c0_i32_0 = arith.constant 0 : i32
    %c0_i32_1 = arith.constant 0 : i32
    return %c0_i32, %c0_i32_0 : i32, i32
  }
  func.func @transform_3(%arg0: i32, %arg1: i32) -> (i32, i32) {
    %c0_i32 = arith.constant 0 : i32
    %c0_i32_0 = arith.constant 0 : i32
    %c0_i32_1 = arith.constant 0 : i32
    return %c0_i32, %c0_i32_0 : i32, i32
  }
  func.func @transform_4(%arg0: i32, %arg1: i32) -> (i32, i32) {
    %c0_i32 = arith.constant 0 : i32
    %c0_i32_0 = arith.constant 0 : i32
    %c0_i32_1 = arith.constant 0 : i32
    return %c0_i32, %c0_i32_0 : i32, i32
  }
  func.func @transform_5(%arg0: i32, %arg1: i32) -> (i32, i32) {
    %c0_i32 = arith.constant 0 : i32
    %c0_i32_0 = arith.constant 0 : i32
    %c0_i32_1 = arith.constant 0 : i32
    return %c0_i32, %c0_i32_0 : i32, i32
  }
  func.func @transform_6(%arg0: i32, %arg1: i32) -> (i32, i32) {
    %c0_i32 = arith.constant 0 : i32
    %c0_i32_0 = arith.constant 0 : i32
    %c0_i32_1 = arith.constant 0 : i32
    return %c0_i32, %c0_i32_0 : i32, i32
  }
  func.func @transform_7(%arg0: i32, %arg1: i32) -> (i32, i32, i32) {
    %c0_i32 = arith.constant 0 : i32
    %c0_i32_0 = arith.constant 0 : i32
    return %arg0, %c0_i32, %arg1 : i32, i32, i32
  }
}

</mosaic_0001>

<llo_original>
// kernel: tpu_custom_call.1
$region0: #{tpu_custom_call.1}
  #allocation0 [shape = 'u32[]', space=smem, size = 0x4, offset = 0x4, fixed_abs, tag = 'smem constant byte address 0x4 - core index']
  #allocation1 [shape = 'u32[144,128]{1,0:T(1,128)}', space=vmem, size = 0x12000, scoped, tag = 'internal scratch']
  #allocation2 [shape = 'f32[1,1]{1,0:T(1,128)S(1)}', space=vmem, size = 0x200, scoped, tag = 'scoped memory for tpu_custom_call.1']
  %s0 = inlined_call_operand.vmem [shape: f32[2,82,256], index: 0, kind: input, shape index: {}]
  %s1 = inlined_call_operand.vmem [shape: bf16[256,82], index: 1, kind: input, shape index: {}]
  %s2 = inlined_call_operand.vmem [shape: f32[256,1], index: 2, kind: input, shape index: {}]
  %s3 = inlined_call_operand.vmem [shape: bf16[256,256], index: 3, kind: input, shape index: {}]
  %s4 = inlined_call_operand.vmem [shape: f32[256,1], index: 4, kind: input, shape index: {}]
  %s5 = inlined_call_operand.vmem [shape: bf16[1,256], index: 5, kind: input, shape index: {}]
  %s6 = inlined_call_operand.<no memory space> [shape: f32[1,1], index: 6, kind: input, shape index: {}]
  %s7 = inlined_call_operand.hbm [shape: f32[2,1,256], index: 7, kind: output, shape index: {}]
  %s8 = sld [smem:[#allocation0]]
  $region61: #{tpu_custom_call.1} parent=0
    _
  %s10 = ssub.s32 1, %s8
  %s11 = scalar_select 0, %s10, %s8
  %v12 = vstv %s6
  %13 = vst [vmem:[#allocation2] sm:$0x1] %v12
  $region1: #{tpu_custom_call.1} parent=0
    #allocation3 [shape = 'u8[2048]{0}', space=vmem, size = 0x800, scoped, tag = 'output window, operand 0']
    #allocation4 [shape = 's32[2]{0}', space=sflag, size = 0x8, scoped, tag = 'scoped memory for tpu_custom_call.1']
    %14 = vsyncpa [#allocation4], 0
    %s15 = scalar_lea.sflag [#allocation4], 1
    %16 = vsyncpa %s15, 0
    loop: start=0, step=1, limit=4
    $region2: #{tpu_custom_call.1} parent=1 // loop_pre_header
      _
    $region3: #{tpu_custom_call.1} parent=1 // loop_header
      %s18 = sphi 0, %s22
      %p19 = scmp.ge.s32.totalorder %s18, 4
      %s25 = sphi 0, %s37
      %s26 = sphi 0, %s33
      %s27 = sphi 0, %s25
      %s28 = sphi 0, %s26
      %s29 = sphi 0, %s27
      %s30 = sphi 0, %s28
      %s42 = sphi 0, %s44
      %s45 = sphi 0, %s42
      %s46 = sphi 0, %s45
      %s62 = sphi 0, %s46
      %s66 = sphi 0, %s66
      %s68 = sphi 0, %s66
      %s69 = sphi 0, %s68
      %s83 = sphi 0, %s69
      %s87 = sphi 0, %s87
      %s89 = sphi 0, %s87
      %s90 = sphi 0, %s89
      %s104 = sphi 0, %s90
      %s108 = sphi 0, %s108
      %s110 = sphi 0, %s108
      %s111 = sphi 0, %s110
      %s125 = sphi 0, %s111
      %s129 = sphi 0, %s129
      %s131 = sphi 0, %s129
      %s132 = sphi 0, %s131
      %s146 = sphi 0, %s132
      %s150 = sphi 0, %s150
      %s152 = sphi 0, %s150
      %s153 = sphi 0, %s152
      %s167 = sphi 0, %s153
      %s171 = sphi 0, %s171
      %s173 = sphi 0, %s171
      %s174 = sphi 0, %s173
      %s188 = sphi 0, %s174
      %s196 = sphi 0, %s198
      %s199 = sphi 0, %s196
      %s200 = sphi 0, %s199
      %s216 = sphi 0, %s200
    $region4: #{tpu_custom_call.1} parent=1 // loop_header_branch
      %21 = sbr.rel (%p19) target = $region8
    $region5: #{tpu_custom_call.1} parent=1 // loop_body
      %s23 = ssub.s32 %s18, 1
      %s24 = ssub.s32 %s18, 2
      %s31 = sadd.s32 1, %s26
      %p32 = scmp.ge.s32.totalorder %s31, 1
      %s33 = scalar_select %p32, 0, %s31
      %s34 = sadd.s32 1, %s25
      %s35 = scalar_select %p32, %s34, %s25
      %p36 = scmp.ge.s32.totalorder %s35, 2
      %s37 = scalar_select %p36, 0, %s35
      %s38 = ssub.s32 %s25, %s37
      %s39 = ssub.s32 %s26, %s33
      %s40 = sor.u32 %s38, %s39
      %p41 = scmp.eq.s32.totalorder %s40, 0
      %s43 = sadd.s32 %s42, 1
      %s44 = scalar_select %p41, %s42, %s43
      %p47 = pneg %p41
      %p48 = scmp.eq.s32.totalorder %s18, 1
      %p49 = por %p47, %p48
      %p50 = scmp.ne.s32.totalorder %s42, %s45
      %p51 = scmp.eq.s32.totalorder %s18, 0
      %p52 = por %p50, %p51
      %p53 = scmp.ne.s32.totalorder %s42, %s45
      %p54 = scmp.eq.s32.totalorder %s23, 1
      %p55 = por %p53, %p54
      %p56 = scmp.ne.s32.totalorder %s45, %s46
      %p57 = scmp.eq.s32.totalorder %s23, 0
      %p58 = por %p56, %p57
      %p59 = scmp.ne.s32.totalorder %s45, %s46
      %p60 = scmp.eq.s32.totalorder %s24, 1
      %p61 = por %p59, %p60
      %p63 = scmp.ne.s32.totalorder %s46, %s62
      %p64 = scmp.eq.s32.totalorder %s24, 0
      %p65 = por %p63, %p64
      %s67 = sadd.s32 %s66, 1
      %p70 = scmp.eq.s32.totalorder %s18, 1
      %p71 = scmp.ne.s32.totalorder %s66, %s68
      %p72 = scmp.eq.s32.totalorder %s18, 0
      %p73 = por %p71, %p72
      %p74 = scmp.ne.s32.totalorder %s66, %s68
      %p75 = scmp.eq.s32.totalorder %s23, 1
      %p76 = por %p74, %p75
      %p77 = scmp.ne.s32.totalorder %s68, %s69
      %p78 = scmp.eq.s32.totalorder %s23, 0
      %p79 = por %p77, %p78
      %p80 = scmp.ne.s32.totalorder %s68, %s69
      %p81 = scmp.eq.s32.totalorder %s24, 1
      %p82 = por %p80, %p81
      %p84 = scmp.ne.s32.totalorder %s69, %s83
      %p85 = scmp.eq.s32.totalorder %s24, 0
      %p86 = por %p84, %p85
      %s88 = sadd.s32 %s87, 1
      %p91 = scmp.eq.s32.totalorder %s18, 1
      %p92 = scmp.ne.s32.totalorder %s87, %s89
      %p93 = scmp.eq.s32.totalorder %s18, 0
      %p94 = por %p92, %p93
      %p95 = scmp.ne.s32.totalorder %s87, %s89
      %p96 = scmp.eq.s32.totalorder %s23, 1
      %p97 = por %p95, %p96
      %p98 = scmp.ne.s32.totalorder %s89, %s90
      %p99 = scmp.eq.s32.totalorder %s23, 0
      %p100 = por %p98, %p99
      %p101 = scmp.ne.s32.totalorder %s89, %s90
      %p102 = scmp.eq.s32.totalorder %s24, 1
      %p103 = por %p101, %p102
      %p105 = scmp.ne.s32.totalorder %s90, %s104
      %p106 = scmp.eq.s32.totalorder %s24, 0
      %p107 = por %p105, %p106
      %s109 = sadd.s32 %s108, 1
      %p112 = scmp.eq.s32.totalorder %s18, 1
      %p113 = scmp.ne.s32.totalorder %s108, %s110
      %p114 = scmp.eq.s32.totalorder %s18, 0
      %p115 = por %p113, %p114
      %p116 = scmp.ne.s32.totalorder %s108, %s110
      %p117 = scmp.eq.s32.totalorder %s23, 1
      %p118 = por %p116, %p117
      %p119 = scmp.ne.s32.totalorder %s110, %s111
      %p120 = scmp.eq.s32.totalorder %s23, 0
      %p121 = por %p119, %p120
      %p122 = scmp.ne.s32.totalorder %s110, %s111
      %p123 = scmp.eq.s32.totalorder %s24, 1
      %p124 = por %p122, %p123
      %p126 = scmp.ne.s32.totalorder %s111, %s125
      %p127 = scmp.eq.s32.totalorder %s24, 0
      %p128 = por %p126, %p127
      %s130 = sadd.s32 %s129, 1
      %p133 = scmp.eq.s32.totalorder %s18, 1
      %p134 = scmp.ne.s32.totalorder %s129, %s131
      %p135 = scmp.eq.s32.totalorder %s18, 0
      %p136 = por %p134, %p135
      %p137 = scmp.ne.s32.totalorder %s129, %s131
      %p138 = scmp.eq.s32.totalorder %s23, 1
      %p139 = por %p137, %p138
      %p140 = scmp.ne.s32.totalorder %s131, %s132
      %p141 = scmp.eq.s32.totalorder %s23, 0
      %p142 = por %p140, %p141
      %p143 = scmp.ne.s32.totalorder %s131, %s132
      %p144 = scmp.eq.s32.totalorder %s24, 1
      %p145 = por %p143, %p144
      %p147 = scmp.ne.s32.totalorder %s132, %s146
      %p148 = scmp.eq.s32.totalorder %s24, 0
      %p149 = por %p147, %p148
      %s151 = sadd.s32 %s150, 1
      %p154 = scmp.eq.s32.totalorder %s18, 1
      %p155 = scmp.ne.s32.totalorder %s150, %s152
      %p156 = scmp.eq.s32.totalorder %s18, 0
      %p157 = por %p155, %p156
      %p158 = scmp.ne.s32.totalorder %s150, %s152
      %p159 = scmp.eq.s32.totalorder %s23, 1
      %p160 = por %p158, %p159
      %p161 = scmp.ne.s32.totalorder %s152, %s153
      %p162 = scmp.eq.s32.totalorder %s23, 0
      %p163 = por %p161, %p162
      %p164 = scmp.ne.s32.totalorder %s152, %s153
      %p165 = scmp.eq.s32.totalorder %s24, 1
      %p166 = por %p164, %p165
      %p168 = scmp.ne.s32.totalorder %s153, %s167
      %p169 = scmp.eq.s32.totalorder %s24, 0
      %p170 = por %p168, %p169
      %s172 = sadd.s32 %s171, 1
      %p175 = scmp.eq.s32.totalorder %s18, 1
      %p176 = scmp.ne.s32.totalorder %s171, %s173
      %p177 = scmp.eq.s32.totalorder %s18, 0
      %p178 = por %p176, %p177
      %p179 = scmp.ne.s32.totalorder %s171, %s173
      %p180 = scmp.eq.s32.totalorder %s23, 1
      %p181 = por %p179, %p180
      %p182 = scmp.ne.s32.totalorder %s173, %s174
      %p183 = scmp.eq.s32.totalorder %s23, 0
      %p184 = por %p182, %p183
      %p185 = scmp.ne.s32.totalorder %s173, %s174
      %p186 = scmp.eq.s32.totalorder %s24, 1
      %p187 = por %p185, %p186
      %p189 = scmp.ne.s32.totalorder %s174, %s188
      %p190 = scmp.eq.s32.totalorder %s24, 0
      %p191 = por %p189, %p190
      %s192 = ssub.s32 %s25, %s37
      %s193 = ssub.s32 %s26, %s33
      %s194 = sor.u32 %s192, %s193
      %p195 = scmp.eq.s32.totalorder %s194, 0
      %s197 = sadd.s32 %s196, 1
      %s198 = scalar_select %p195, %s196, %s197
      %p201 = pneg %p195
      %p202 = scmp.eq.s32.totalorder %s18, 1
      %p203 = por %p201, %p202
      %p204 = scmp.ne.s32.totalorder %s196, %s199
      %p205 = scmp.eq.s32.totalorder %s18, 0
      %p206 = por %p204, %p205
      %p207 = scmp.ne.s32.totalorder %s196, %s199
      %p208 = scmp.eq.s32.totalorder %s23, 1
      %p209 = por %p207, %p208
      %p210 = scmp.ne.s32.totalorder %s199, %s200
      %p211 = scmp.eq.s32.totalorder %s23, 0
      %p212 = por %p210, %p211
      %p213 = scmp.ne.s32.totalorder %s199, %s200
      %p214 = scmp.eq.s32.totalorder %s24, 1
      %p215 = por %p213, %p214
      %p217 = scmp.ne.s32.totalorder %s200, %s216
      %p218 = scmp.eq.s32.totalorder %s24, 0
      %p219 = por %p217, %p218
      %p220 = scmp.le.s32.totalorder 1, %s18
      %p221 = scmp.lt.s32.totalorder %s18, 3
      %p222 = pnand %p220, %p221
      %p223 = pneg %p222
      // Predicated region
      $region9: #{tpu_custom_call.1} parent=5 // pred_check
        _
      $region10: #{tpu_custom_call.1} parent=5 // pred_check_branch
        %225 = sbr.rel (%p222) target = $region12
      $region11: #{tpu_custom_call.1} parent=5 // pred_region
        %s226 = ssub.s32 %s18, 1
        // Predicated region
        $region13: #{tpu_custom_call.1} parent=11 // pred_check
          %p227 = pneg %p79
        $region14: #{tpu_custom_call.1} parent=11 // pred_check_branch
          %229 = sbr.rel (%p227) target = $region16
        $region15: #{tpu_custom_call.1} parent=11 // pred_region
          _
        $region16: #{tpu_custom_call.1} parent=11 // pred_fallthru
          _
        // Predicated region
        $region17: #{tpu_custom_call.1} parent=11 // pred_check
          %p230 = pneg %p100
        $region18: #{tpu_custom_call.1} parent=11 // pred_check_branch
          %232 = sbr.rel (%p230) target = $region20
        $region19: #{tpu_custom_call.1} parent=11 // pred_region
          _
        $region20: #{tpu_custom_call.1} parent=11 // pred_fallthru
          _
        // Predicated region
        $region21: #{tpu_custom_call.1} parent=11 // pred_check
          %p233 = pneg %p121
        $region22: #{tpu_custom_call.1} parent=11 // pred_check_branch
          %235 = sbr.rel (%p233) target = $region24
        $region23: #{tpu_custom_call.1} parent=11 // pred_region
          _
        $region24: #{tpu_custom_call.1} parent=11 // pred_fallthru
          _
        // Predicated region
        $region25: #{tpu_custom_call.1} parent=11 // pred_check
          %p236 = pneg %p142
        $region26: #{tpu_custom_call.1} parent=11 // pred_check_branch
          %238 = sbr.rel (%p236) target = $region28
        $region27: #{tpu_custom_call.1} parent=11 // pred_region
          _
        $region28: #{tpu_custom_call.1} parent=11 // pred_fallthru
          _
        // Predicated region
        $region29: #{tpu_custom_call.1} parent=11 // pred_check
          %p239 = pneg %p163
        $region30: #{tpu_custom_call.1} parent=11 // pred_check_branch
          %241 = sbr.rel (%p239) target = $region32
        $region31: #{tpu_custom_call.1} parent=11 // pred_region
          _
        $region32: #{tpu_custom_call.1} parent=11 // pred_fallthru
          _
        // Predicated region
        $region33: #{tpu_custom_call.1} parent=11 // pred_check
          %p242 = pneg %p184
        $region34: #{tpu_custom_call.1} parent=11 // pred_check_branch
          %244 = sbr.rel (%p242) target = $region36
        $region35: #{tpu_custom_call.1} parent=11 // pred_region
          _
        $region36: #{tpu_custom_call.1} parent=11 // pred_fallthru
          _
      $region12: #{tpu_custom_call.1} parent=5 // pred_fallthru
        _
      %p245 = scmp.lt.s32.totalorder %s18, 2
      // Predicated region
      $region37: #{tpu_custom_call.1} parent=5 // pred_check
        %p246 = pneg %p245
      $region38: #{tpu_custom_call.1} parent=5 // pred_check_branch
        %248 = sbr.rel (%p246) target = $region40
      $region39: #{tpu_custom_call.1} parent=5 // pred_region
        // Predicated region
        $region41: #{tpu_custom_call.1} parent=39 // pred_check
          %p249 = pneg %p52
        $region42: #{tpu_custom_call.1} parent=39 // pred_check_branch
          %251 = sbr.rel (%p249) target = $region44
        $region43: #{tpu_custom_call.1} parent=39 // pred_region
          %s252 = smul.u32 2, %s26
          %p253 = scmp.lt.s32.totalorder %s25, 1
          %s254 = scalar_select %p253, %s25, 1
          %p255 = scmp.lt.s32.totalorder %s252, 1
          %s256 = scalar_select %p255, %s252, 1
          %s257 = smul.addr %s254, 22
          %s258 = sadd.s32 %s256, %s257
          %s259 = smul.addr %s258, 8
          %s260 = scalar_lea.vmem %s0, %s259
          %s261 = smul.u32 2, %s26
        $region44: #{tpu_custom_call.1} parent=39 // pred_fallthru
          _
      $region40: #{tpu_custom_call.1} parent=5 // pred_fallthru
        _
      %p262 = scmp.le.s32.totalorder 1, %s18
      %p263 = scmp.lt.s32.totalorder %s18, 3
      %p264 = pnand %p262, %p263
      %p265 = pneg %p264
      // Predicated region
      $region45: #{tpu_custom_call.1} parent=5 // pred_check
        _
      $region46: #{tpu_custom_call.1} parent=5 // pred_check_branch
        %267 = sbr.rel (%p264) target = $region48
      $region47: #{tpu_custom_call.1} parent=5 // pred_region
        %s268 = ssub.s32 %s18, 1
        %s269 = smul.u32 2, %s28
        %p270 = scmp.lt.s32.totalorder %s27, 1
        %s271 = scalar_select %p270, %s27, 1
        %p272 = scmp.lt.s32.totalorder %s269, 1
        %s273 = scalar_select %p272, %s269, 1
        %s274 = smul.addr %s271, 22
        %s275 = sadd.s32 %s273, %s274
        %s276 = smul.addr %s275, 8
        %s277 = scalar_lea.vmem %s0, %s276
        %p278 = pneg %p58
        %p279 = pneg %p55
        %p280 = pneg %p79
        %p281 = pneg %p76
        %p282 = pneg %p100
        %p283 = pneg %p97
        %p284 = pneg %p121
        %p285 = pneg %p118
        %p286 = pneg %p142
        %p287 = pneg %p139
        %p288 = pneg %p163
        %p289 = pneg %p160
        %p290 = pneg %p184
        %p291 = pneg %p181
        %p292 = pneg %p212
        %p293 = pneg %p209
        %s294 = sand.u32 %s199, 1
        %s295 = scalar_lea.sflag [#allocation4], %s294
        %s296 = sand.u32 %s199, 1
        %s297 = smul.addr %s296, 2
        %s298 = scalar_lea.vmem [#allocation3], %s297
        %s299 = smul.u32 2, %s28
        %p300 = scmp.lt.s32.totalorder %s27, 1
        %s301 = scalar_select %p300, %s27, 1
        %p302 = scmp.lt.s32.totalorder %s299, 1
        %s303 = scalar_select %p302, %s299, 1
        %s304 = smul.addr %s301, 22
        %s305 = sadd.s32 %s303, %s304
        %s306 = smul.addr %s305, 8
        %s307 = scalar_lea.vmem %s0, %s306
        %s308 = smul.u32 2, %s28
        %s309 = smul.u32 2, %s28
        %v311 = vld [vmem:[%s1] sm:$0xf]
        %v312 = vld [vmem:[%s1 + $0x4] sm:$0xf]
        %v313 = vld [vmem:[%s1 + $0x8] sm:$0xf]
        %v314 = vld [vmem:[%s1 + $0xc] sm:$0xf]
        %v315 = vld [vmem:[%s1 + $0x10] sm:$0xf]
        %v316 = vld [vmem:[%s1 + $0x14] sm:$0xf]
        %v317 = vld [vmem:[%s1 + $0x18] sm:$0xf]
        %v318 = vld [vmem:[%s1 + $0x1c] sm:$0xf]
        %v319 = vld [vmem:[%s1 + $0x20] sm:$0xf]
        %v320 = vld [vmem:[%s1 + $0x24] sm:$0xf]
        %v321 = vld [vmem:[%s1 + $0x28] sm:$0xf]
        %v322 = vld [vmem:[%s1 + $0x2c] sm:$0xf]
        %v323 = vld [vmem:[%s1 + $0x30] sm:$0xf]
        %v324 = vld [vmem:[%s1 + $0x34] sm:$0xf]
        %v325 = vld [vmem:[%s1 + $0x38] sm:$0xf]
        %v326 = vld [vmem:[%s1 + $0x3c] sm:$0xf]
        %v327 = vld [vmem:[%s1 + $0x40] sm:$0xf]
        %v328 = vld [vmem:[%s1 + $0x44] sm:$0xf]
        %v329 = vld [vmem:[%s1 + $0x48] sm:$0xf]
        %v330 = vld [vmem:[%s1 + $0x4c] sm:$0xf]
        %v331 = vld [vmem:[%s1 + $0x50] sm:$0xf]
        %v332 = vld [vmem:[%s1 + $0x54] sm:$0xf]
        %v333 = vld [vmem:[%s1 + $0x58] sm:$0xf]
        %v334 = vld [vmem:[%s1 + $0x5c] sm:$0xf]
        %v335 = vld [vmem:[%s1 + $0x60] sm:$0xf]
        %v336 = vld [vmem:[%s1 + $0x64] sm:$0xf]
        %v337 = vld [vmem:[%s1 + $0x68] sm:$0xf]
        %v338 = vld [vmem:[%s1 + $0x6c] sm:$0xf]
        %v339 = vld [vmem:[%s1 + $0x70] sm:$0xf]
        %v340 = vld [vmem:[%s1 + $0x74] sm:$0xf]
        %v341 = vld [vmem:[%s1 + $0x78] sm:$0xf]
        %v342 = vld [vmem:[%s1 + $0x7c] sm:$0xf]
        %v343 = vld [vmem:[%s2] sm:$0xff]
        %v344 = vld [vmem:[%s2 + $0x8] sm:$0xff]
        %v345 = vld [vmem:[%s2 + $0x10] sm:$0xff]
        %v346 = vld [vmem:[%s2 + $0x18] sm:$0xff]
        %v347 = vld [vmem:[%s2 + $0x20] sm:$0xff]
        %v348 = vld [vmem:[%s2 + $0x28] sm:$0xff]
        %v349 = vld [vmem:[%s2 + $0x30] sm:$0xff]
        %v350 = vld [vmem:[%s2 + $0x38] sm:$0xff]
        %v351 = vld [vmem:[%s2 + $0x40] sm:$0xff]
        %v352 = vld [vmem:[%s2 + $0x48] sm:$0xff]
        %v353 = vld [vmem:[%s2 + $0x50] sm:$0xff]
        %v354 = vld [vmem:[%s2 + $0x58] sm:$0xff]
        %v355 = vld [vmem:[%s2 + $0x60] sm:$0xff]
        %v356 = vld [vmem:[%s2 + $0x68] sm:$0xff]
        %v357 = vld [vmem:[%s2 + $0x70] sm:$0xff]
        %v358 = vld [vmem:[%s2 + $0x78] sm:$0xff]
        %v359 = vld [vmem:[%s2 + $0x80] sm:$0xff]
        %v360 = vld [vmem:[%s2 + $0x88] sm:$0xff]
        %v361 = vld [vmem:[%s2 + $0x90] sm:$0xff]
        %v362 = vld [vmem:[%s2 + $0x98] sm:$0xff]
        %v363 = vld [vmem:[%s2 + $0xa0] sm:$0xff]
        %v364 = vld [vmem:[%s2 + $0xa8] sm:$0xff]
        %v365 = vld [vmem:[%s2 + $0xb0] sm:$0xff]
        %v366 = vld [vmem:[%s2 + $0xb8] sm:$0xff]
        %v367 = vld [vmem:[%s2 + $0xc0] sm:$0xff]
        %v368 = vld [vmem:[%s2 + $0xc8] sm:$0xff]
        %v369 = vld [vmem:[%s2 + $0xd0] sm:$0xff]
        %v370 = vld [vmem:[%s2 + $0xd8] sm:$0xff]
        %v371 = vld [vmem:[%s2 + $0xe0] sm:$0xff]
        %v372 = vld [vmem:[%s2 + $0xe8] sm:$0xff]
        %v373 = vld [vmem:[%s2 + $0xf0] sm:$0xff]
        %v374 = vld [vmem:[%s2 + $0xf8] sm:$0xff]
        %v375 = vld [vmem:[%s3] sm:$0xff]
        %v376 = vld [vmem:[%s3 + $0x8] sm:$0xff]
        %v377 = vld [vmem:[%s3 + $0x10] sm:$0xff]
        %v378 = vld [vmem:[%s3 + $0x18] sm:$0xff]
        %v379 = vld [vmem:[%s3 + $0x20] sm:$0xff]
        %v380 = vld [vmem:[%s3 + $0x28] sm:$0xff]
        %v381 = vld [vmem:[%s3 + $0x30] sm:$0xff]
        %v382 = vld [vmem:[%s3 + $0x38] sm:$0xff]
        %v383 = vld [vmem:[%s3 + $0x40] sm:$0xff]
        %v384 = vld [vmem:[%s3 + $0x48] sm:$0xff]
        %v385 = vld [vmem:[%s3 + $0x50] sm:$0xff]
        %v386 = vld [vmem:[%s3 + $0x58] sm:$0xff]
        %v387 = vld [vmem:[%s3 + $0x60] sm:$0xff]
        %v388 = vld [vmem:[%s3 + $0x68] sm:$0xff]
        %v389 = vld [vmem:[%s3 + $0x70] sm:$0xff]
        %v390 = vld [vmem:[%s3 + $0x78] sm:$0xff]
        %v391 = vld [vmem:[%s3 + $0x80] sm:$0xff]
        %v392 = vld [vmem:[%s3 + $0x88] sm:$0xff]
        %v393 = vld [vmem:[%s3 + $0x90] sm:$0xff]
        %v394 = vld [vmem:[%s3 + $0x98] sm:$0xff]
        %v395 = vld [vmem:[%s3 + $0xa0] sm:$0xff]
        %v396 = vld [vmem:[%s3 + $0xa8] sm:$0xff]
        %v397 = vld [vmem:[%s3 + $0xb0] sm:$0xff]
        %v398 = vld [vmem:[%s3 + $0xb8] sm:$0xff]
        %v399 = vld [vmem:[%s3 + $0xc0] sm:$0xff]
        %v400 = vld [vmem:[%s3 + $0xc8] sm:$0xff]
        %v401 = vld [vmem:[%s3 + $0xd0] sm:$0xff]
        %v402 = vld [vmem:[%s3 + $0xd8] sm:$0xff]
        %v403 = vld [vmem:[%s3 + $0xe0] sm:$0xff]
        %v404 = vld [vmem:[%s3 + $0xe8] sm:$0xff]
        %v405 = vld [vmem:[%s3 + $0xf0] sm:$0xff]
        %v406 = vld [vmem:[%s3 + $0xf8] sm:$0xff]
        %v407 = vld [vmem:[%s4] sm:$0xff]
        %v408 = vld [vmem:[%s4 + $0x8] sm:$0xff]
        %v409 = vld [vmem:[%s4 + $0x10] sm:$0xff]
        %v410 = vld [vmem:[%s4 + $0x18] sm:$0xff]
        %v411 = vld [vmem:[%s4 + $0x20] sm:$0xff]
        %v412 = vld [vmem:[%s4 + $0x28] sm:$0xff]
        %v413 = vld [vmem:[%s4 + $0x30] sm:$0xff]
        %v414 = vld [vmem:[%s4 + $0x38] sm:$0xff]
        %v415 = vld [vmem:[%s4 + $0x40] sm:$0xff]
        %v416 = vld [vmem:[%s4 + $0x48] sm:$0xff]
        %v417 = vld [vmem:[%s4 + $0x50] sm:$0xff]
        %v418 = vld [vmem:[%s4 + $0x58] sm:$0xff]
        %v419 = vld [vmem:[%s4 + $0x60] sm:$0xff]
        %v420 = vld [vmem:[%s4 + $0x68] sm:$0xff]
        %v421 = vld [vmem:[%s4 + $0x70] sm:$0xff]
        %v422 = vld [vmem:[%s4 + $0x78] sm:$0xff]
        %v423 = vld [vmem:[%s4 + $0x80] sm:$0xff]
        %v424 = vld [vmem:[%s4 + $0x88] sm:$0xff]
        %v425 = vld [vmem:[%s4 + $0x90] sm:$0xff]
        %v426 = vld [vmem:[%s4 + $0x98] sm:$0xff]
        %v427 = vld [vmem:[%s4 + $0xa0] sm:$0xff]
        %v428 = vld [vmem:[%s4 + $0xa8] sm:$0xff]
        %v429 = vld [vmem:[%s4 + $0xb0] sm:$0xff]
        %v430 = vld [vmem:[%s4 + $0xb8] sm:$0xff]
        %v431 = vld [vmem:[%s4 + $0xc0] sm:$0xff]
        %v432 = vld [vmem:[%s4 + $0xc8] sm:$0xff]
        %v433 = vld [vmem:[%s4 + $0xd0] sm:$0xff]
        %v434 = vld [vmem:[%s4 + $0xd8] sm:$0xff]
        %v435 = vld [vmem:[%s4 + $0xe0] sm:$0xff]
        %v436 = vld [vmem:[%s4 + $0xe8] sm:$0xff]
        %v437 = vld [vmem:[%s4 + $0xf0] sm:$0xff]
        %v438 = vld [vmem:[%s4 + $0xf8] sm:$0xff]
        %v439 = vld [vmem:[%s5] sm:$0x3]
        %v440 = vld [vmem:[#allocation2] sm:$0x1]
        %v441 = vld [vmem:[%s307] sm:$0xff]
        %v442 = vld [vmem:[%s307 + $0x8] sm:$0xff]
        %v443 = vld [vmem:[%s307 + $0x10] sm:$0xff]
        %v444 = vld [vmem:[%s307 + $0x18] sm:$0xff]
        %v445 = vld [vmem:[%s307 + $0x20] sm:$0xff]
        %v446 = vld [vmem:[%s307 + $0x28] sm:$0xff]
        %v447 = vld [vmem:[%s307 + $0x30] sm:$0xff]
        %v448 = vld [vmem:[%s307 + $0x38] sm:$0xff]
        %v449 = vld [vmem:[%s307 + $0x40] sm:$0xff]
        %v450 = vld [vmem:[%s307 + $0x48] sm:$0xff]
        %v451 = vld [vmem:[%s307 + $0x50] sm:$0xff]
        %v452 = vld [vmem:[%s307 + $0x58] sm:$0xff]
        %v453 = vld [vmem:[%s307 + $0x60] sm:$0xff]
        %v454 = vld [vmem:[%s307 + $0x68] sm:$0xff]
        %v455 = vld [vmem:[%s307 + $0x70] sm:$0xff]
        %v456 = vld [vmem:[%s307 + $0x78] sm:$0xff]
        %v457 = vld [vmem:[%s307 + $0x80] sm:$0xff]
        %v458 = vld [vmem:[%s307 + $0x88] sm:$0xff]
        %v459 = vld [vmem:[%s307 + $0x90] sm:$0xff]
        %v460 = vld [vmem:[%s307 + $0x98] sm:$0xff]
        %v461 = vld [vmem:[%s307 + $0xa0] sm:$0x3]
        %v462 = vld [vmem:[%s307 + $0xa8] sm:$0x3]
        %v463 = vpack.c.bf16 %v443, %v441
        %v464 = vpack.c.bf16 %v444, %v442
        %v465 = vpack.c.bf16 %v447, %v445
        %v466 = vpack.c.bf16 %v448, %v446
        %v467 = vpack.c.bf16 %v451, %v449
        %v468 = vpack.c.bf16 %v452, %v450
        %v469 = vpack.c.bf16 %v455, %v453
        %v470 = vpack.c.bf16 %v456, %v454
        %v471 = vpack.c.bf16 %v459, %v457
        %v472 = vpack.c.bf16 %v460, %v458
        %v473 = vpack.c.bf16 %v461, %v461
        %v474 = vpack.c.bf16 %v462, %v462
        %476 = vset.pattern.permute.xlu0 0
        %477 = vperm.xlu0 %476, %v343
        %v478 = vpop.permute.xlu0 %477
        %481 = vset.pattern.permute.xlu0 0
        %482 = vperm.xlu0 %481, %v344
        %v483 = vpop.permute.xlu0 %482
        %486 = vset.pattern.permute.xlu0 0
        %487 = vperm.xlu0 %486, %v345
        %v488 = vpop.permute.xlu0 %487
        %491 = vset.pattern.permute.xlu0 0
        %492 = vperm.xlu0 %491, %v346
        %v493 = vpop.permute.xlu0 %492
        %496 = vset.pattern.permute.xlu0 0
        %497 = vperm.xlu0 %496, %v347
        %v498 = vpop.permute.xlu0 %497
        %501 = vset.pattern.permute.xlu0 0
        %502 = vperm.xlu0 %501, %v348
        %v503 = vpop.permute.xlu0 %502
        %506 = vset.pattern.permute.xlu0 0
        %507 = vperm.xlu0 %506, %v349
        %v508 = vpop.permute.xlu0 %507
        %511 = vset.pattern.permute.xlu0 0
        %512 = vperm.xlu0 %511, %v350
        %v513 = vpop.permute.xlu0 %512
        %516 = vset.pattern.permute.xlu0 0
        %517 = vperm.xlu0 %516, %v351
        %v518 = vpop.permute.xlu0 %517
        %521 = vset.pattern.permute.xlu0 0
        %522 = vperm.xlu0 %521, %v352
        %v523 = vpop.permute.xlu0 %522
        %526 = vset.pattern.permute.xlu0 0
        %527 = vperm.xlu0 %526, %v353
        %v528 = vpop.permute.xlu0 %527
        %531 = vset.pattern.permute.xlu0 0
        %532 = vperm.xlu0 %531, %v354
        %v533 = vpop.permute.xlu0 %532
        %536 = vset.pattern.permute.xlu0 0
        %537 = vperm.xlu0 %536, %v355
        %v538 = vpop.permute.xlu0 %537
        %541 = vset.pattern.permute.xlu0 0
        %542 = vperm.xlu0 %541, %v356
        %v543 = vpop.permute.xlu0 %542
        %546 = vset.pattern.permute.xlu0 0
        %547 = vperm.xlu0 %546, %v357
        %v548 = vpop.permute.xlu0 %547
        %551 = vset.pattern.permute.xlu0 0
        %552 = vperm.xlu0 %551, %v358
        %v553 = vpop.permute.xlu0 %552
        %556 = vset.pattern.permute.xlu0 0
        %557 = vperm.xlu0 %556, %v359
        %v558 = vpop.permute.xlu0 %557
        %561 = vset.pattern.permute.xlu0 0
        %562 = vperm.xlu0 %561, %v360
        %v563 = vpop.permute.xlu0 %562
        %566 = vset.pattern.permute.xlu0 0
        %567 = vperm.xlu0 %566, %v361
        %v568 = vpop.permute.xlu0 %567
        %571 = vset.pattern.permute.xlu0 0
        %572 = vperm.xlu0 %571, %v362
        %v573 = vpop.permute.xlu0 %572
        %576 = vset.pattern.permute.xlu0 0
        %577 = vperm.xlu0 %576, %v363
        %v578 = vpop.permute.xlu0 %577
        %581 = vset.pattern.permute.xlu0 0
        %582 = vperm.xlu0 %581, %v364
        %v583 = vpop.permute.xlu0 %582
        %586 = vset.pattern.permute.xlu0 0
        %587 = vperm.xlu0 %586, %v365
        %v588 = vpop.permute.xlu0 %587
        %591 = vset.pattern.permute.xlu0 0
        %592 = vperm.xlu0 %591, %v366
        %v593 = vpop.permute.xlu0 %592
        %596 = vset.pattern.permute.xlu0 0
        %597 = vperm.xlu0 %596, %v367
        %v598 = vpop.permute.xlu0 %597
        %601 = vset.pattern.permute.xlu0 0
        %602 = vperm.xlu0 %601, %v368
        %v603 = vpop.permute.xlu0 %602
        %606 = vset.pattern.permute.xlu0 0
        %607 = vperm.xlu0 %606, %v369
        %v608 = vpop.permute.xlu0 %607
        %611 = vset.pattern.permute.xlu0 0
        %612 = vperm.xlu0 %611, %v370
        %v613 = vpop.permute.xlu0 %612
        %616 = vset.pattern.permute.xlu0 0
        %617 = vperm.xlu0 %616, %v371
        %v618 = vpop.permute.xlu0 %617
        %621 = vset.pattern.permute.xlu0 0
        %622 = vperm.xlu0 %621, %v372
        %v623 = vpop.permute.xlu0 %622
        %626 = vset.pattern.permute.xlu0 0
        %627 = vperm.xlu0 %626, %v373
        %v628 = vpop.permute.xlu0 %627
        %631 = vset.pattern.permute.xlu0 0
        %632 = vperm.xlu0 %631, %v374
        %v633 = vpop.permute.xlu0 %632
        %v667 = vunpack.c.l.b16 %v311
        %v668 = vunpack.c.l.b16 %v312
        %v669 = vunpack.c.l.b16 %v313
        %v670 = vunpack.c.l.b16 %v314
        %v671 = vunpack.c.l.b16 %v315
        %v672 = vunpack.c.l.b16 %v316
        %v673 = vunpack.c.l.b16 %v317
        %v674 = vunpack.c.l.b16 %v318
        %v675 = vunpack.c.l.b16 %v319
        %v676 = vunpack.c.l.b16 %v320
        %v677 = vunpack.c.l.b16 %v321
        %v678 = vunpack.c.l.b16 %v322
        %v679 = vunpack.c.l.b16 %v323
        %v680 = vunpack.c.l.b16 %v324
        %v681 = vunpack.c.l.b16 %v325
        %v682 = vunpack.c.l.b16 %v326
        %v683 = vunpack.c.l.b16 %v327
        %v684 = vunpack.c.l.b16 %v328
        %v685 = vunpack.c.l.b16 %v329
        %v686 = vunpack.c.l.b16 %v330
        %v687 = vunpack.c.l.b16 %v331
        %v688 = vunpack.c.l.b16 %v332
        %v689 = vunpack.c.l.b16 %v333
        %v690 = vunpack.c.l.b16 %v334
        %v691 = vunpack.c.l.b16 %v335
        %v692 = vunpack.c.l.b16 %v336
        %v693 = vunpack.c.l.b16 %v337
        %v694 = vunpack.c.l.b16 %v338
        %v695 = vunpack.c.l.b16 %v339
        %v696 = vunpack.c.l.b16 %v340
        %v697 = vunpack.c.l.b16 %v341
        %v698 = vunpack.c.l.b16 %v342
        %v699 = vpack.c.b16 %v668, %v667
        %v700 = vpack.c.b16 %v670, %v669
        %v701 = vpack.c.b16 %v672, %v671
        %v702 = vpack.c.b16 %v674, %v673
        %v703 = vpack.c.b16 %v676, %v675
        %v704 = vpack.c.b16 %v678, %v677
        %v705 = vpack.c.b16 %v680, %v679
        %v706 = vpack.c.b16 %v682, %v681
        %v707 = vpack.c.b16 %v684, %v683
        %v708 = vpack.c.b16 %v686, %v685
        %v709 = vpack.c.b16 %v688, %v687
        %v710 = vpack.c.b16 %v690, %v689
        %v711 = vpack.c.b16 %v692, %v691
        %v712 = vpack.c.b16 %v694, %v693
        %v713 = vpack.c.b16 %v696, %v695
        %v714 = vpack.c.b16 %v698, %v697
        %vm715 = vcmask 670720
        %v717 = vsel %vm715, %v699, 0
        %v720 = vsel %vm715, %v700, 0
        %v723 = vsel %vm715, %v701, 0
        %v726 = vsel %vm715, %v702, 0
        %v729 = vsel %vm715, %v703, 0
        %v732 = vsel %vm715, %v704, 0
        %v735 = vsel %vm715, %v705, 0
        %v738 = vsel %vm715, %v706, 0
        %v741 = vsel %vm715, %v707, 0
        %v744 = vsel %vm715, %v708, 0
        %v747 = vsel %vm715, %v709, 0
        %v750 = vsel %vm715, %v710, 0
        %v753 = vsel %vm715, %v711, 0
        %v756 = vsel %vm715, %v712, 0
        %v759 = vsel %vm715, %v713, 0
        %v762 = vsel %vm715, %v714, 0
        %vm764 = vcmask 1040384
        %v766 = vsel %vm764, %v473, 0
        %v769 = vsel %vm764, %v474, 0
        %771 = vmatprep.subr.bf16.mxu0 0
        %772 = vmatpush1.bf16.msra.mxu0 0
        %773 = vmatprep.subr.bf16.mxu0 0
        %774 = vmatpush1.bf16.msra.mxu0 0
        %775 = vmatprep.subr.bf16.mxu0 %v769
        %776 = vmatpush1.bf16.msra.mxu0 %v766
        %777 = vmatprep.subr.bf16.mxu0 %v472
        %778 = vmatpush1.bf16.msra.mxu0 %v471
        %779 = vmatprep.subr.bf16.mxu0 %v470
        %780 = vmatpush1.bf16.msra.mxu0 %v469
        %781 = vmatprep.subr.bf16.mxu0 %v468
        %782 = vmatpush1.bf16.msra.mxu0 %v467
        %783 = vmatprep.subr.bf16.mxu0 %v466
        %784 = vmatpush1.bf16.msra.mxu0 %v465
        %785 = vmatprep.subr.bf16.mxu0 %v464
        %786 = vmatpush1.bf16.msra.mxu0 %v463
        %787 = vmatprep.subr.bf16.mxu0 0
        %788 = vmatpush2.bf16.msra.mxu0 0
        %789 = vmatprep.subr.bf16.mxu0 0
        %790 = vmatpush2.bf16.msra.mxu0 0
        %791 = vmatprep.subr.bf16.mxu0 0
        %792 = vmatpush2.bf16.msra.mxu0 0
        %793 = vmatprep.subr.bf16.mxu0 0
        %794 = vmatpush2.bf16.msra.mxu0 0
        %795 = vmatprep.subr.bf16.mxu0 0
        %796 = vmatpush2.bf16.msra.mxu0 0
        %797 = vmatprep.subr.bf16.mxu0 0
        %798 = vmatpush2.bf16.msra.mxu0 0
        %799 = vmatprep.subr.bf16.mxu0 0
        %800 = vmatpush2.bf16.msra.mxu0 0
        %801 = vmatprep.subr.bf16.mxu0 0
        %802 = vmatpush2.bf16.msra.mxu0 0
        %803 = vmatprep.mubr.bf16.mxu0 0
        %804 = vmatmul.mubr.bf16.gmra.mxu0 %v717
        %v805 = vpop.f32.mrf.mxu0
        %v806 = vadd.f32 %v478, %v805
        %v807 = vpop.f32.mrf.mxu0
        %v808 = vadd.f32 %v478, %v807
        %v809 = vpop.f32.mrf.mxu0
        %v810 = vadd.f32 %v483, %v809
        %v811 = vpop.f32.mrf.mxu0
        %v812 = vadd.f32 %v483, %v811
        %813 = vmatprep.mubr.bf16.mxu0 0
        %814 = vmatmul.mubr.bf16.gmra.mxu0 %v720
        %v815 = vpop.f32.mrf.mxu0
        %v816 = vadd.f32 %v488, %v815
        %v817 = vpop.f32.mrf.mxu0
        %v818 = vadd.f32 %v488, %v817
        %v819 = vpop.f32.mrf.mxu0
        %v820 = vadd.f32 %v493, %v819
        %v821 = vpop.f32.mrf.mxu0
        %v822 = vadd.f32 %v493, %v821
        %823 = vmatprep.mubr.bf16.mxu0 0
        %824 = vmatmul.mubr.bf16.gmra.mxu0 %v723
        %v825 = vpop.f32.mrf.mxu0
        %v826 = vadd.f32 %v498, %v825
        %v827 = vpop.f32.mrf.mxu0
        %v828 = vadd.f32 %v498, %v827
        %v829 = vpop.f32.mrf.mxu0
        %v830 = vadd.f32 %v503, %v829
        %v831 = vpop.f32.mrf.mxu0
        %v832 = vadd.f32 %v503, %v831
        %833 = vmatprep.mubr.bf16.mxu0 0
        %834 = vmatmul.mubr.bf16.gmra.mxu0 %v726
        %v835 = vpop.f32.mrf.mxu0
        %v836 = vadd.f32 %v508, %v835
        %v837 = vpop.f32.mrf.mxu0
        %v838 = vadd.f32 %v508, %v837
        %v839 = vpop.f32.mrf.mxu0
        %v840 = vadd.f32 %v513, %v839
        %v841 = vpop.f32.mrf.mxu0
        %v842 = vadd.f32 %v513, %v841
        %843 = vmatprep.mubr.bf16.mxu0 0
        %844 = vmatmul.mubr.bf16.gmra.mxu0 %v729
        %v845 = vpop.f32.mrf.mxu0
        %v846 = vadd.f32 %v518, %v845
        %v847 = vpop.f32.mrf.mxu0
        %v848 = vadd.f32 %v518, %v847
        %v849 = vpop.f32.mrf.mxu0
        %v850 = vadd.f32 %v523, %v849
        %v851 = vpop.f32.mrf.mxu0
        %v852 = vadd.f32 %v523, %v851
        %853 = vmatprep.mubr.bf16.mxu0 0
        %854 = vmatmul.mubr.bf16.gmra.mxu0 %v732
        %v855 = vpop.f32.mrf.mxu0
        %v856 = vadd.f32 %v528, %v855
        %v857 = vpop.f32.mrf.mxu0
        %v858 = vadd.f32 %v528, %v857
        %v859 = vpop.f32.mrf.mxu0
        %v860 = vadd.f32 %v533, %v859
        %v861 = vpop.f32.mrf.mxu0
        %v862 = vadd.f32 %v533, %v861
        %863 = vmatprep.mubr.bf16.mxu0 0
        %864 = vmatmul.mubr.bf16.gmra.mxu0 %v735
        %v865 = vpop.f32.mrf.mxu0
        %v866 = vadd.f32 %v538, %v865
        %v867 = vpop.f32.mrf.mxu0
        %v868 = vadd.f32 %v538, %v867
        %v869 = vpop.f32.mrf.mxu0
        %v870 = vadd.f32 %v543, %v869
        %v871 = vpop.f32.mrf.mxu0
        %v872 = vadd.f32 %v543, %v871
        %873 = vmatprep.mubr.bf16.mxu0 0
        %874 = vmatmul.mubr.bf16.gmra.mxu0 %v738
        %v875 = vpop.f32.mrf.mxu0
        %v876 = vadd.f32 %v548, %v875
        %v877 = vpop.f32.mrf.mxu0
        %v878 = vadd.f32 %v548, %v877
        %v879 = vpop.f32.mrf.mxu0
        %v880 = vadd.f32 %v553, %v879
        %v881 = vpop.f32.mrf.mxu0
        %v882 = vadd.f32 %v553, %v881
        %883 = vmatprep.mubr.bf16.mxu0 0
        %884 = vmatmul.mubr.bf16.gmra.mxu0 %v741
        %v885 = vpop.f32.mrf.mxu0
        %v886 = vadd.f32 %v558, %v885
        %v887 = vpop.f32.mrf.mxu0
        %v888 = vadd.f32 %v558, %v887
        %v889 = vpop.f32.mrf.mxu0
        %v890 = vadd.f32 %v563, %v889
        %v891 = vpop.f32.mrf.mxu0
        %v892 = vadd.f32 %v563, %v891
        %893 = vmatprep.mubr.bf16.mxu0 0
        %894 = vmatmul.mubr.bf16.gmra.mxu0 %v744
        %v895 = vpop.f32.mrf.mxu0
        %v896 = vadd.f32 %v568, %v895
        %v897 = vpop.f32.mrf.mxu0
        %v898 = vadd.f32 %v568, %v897
        %v899 = vpop.f32.mrf.mxu0
        %v900 = vadd.f32 %v573, %v899
        %v901 = vpop.f32.mrf.mxu0
        %v902 = vadd.f32 %v573, %v901
        %903 = vmatprep.mubr.bf16.mxu0 0
        %904 = vmatmul.mubr.bf16.gmra.mxu0 %v747
        %v905 = vpop.f32.mrf.mxu0
        %v906 = vadd.f32 %v578, %v905
        %v907 = vpop.f32.mrf.mxu0
        %v908 = vadd.f32 %v578, %v907
        %v909 = vpop.f32.mrf.mxu0
        %v910 = vadd.f32 %v583, %v909
        %v911 = vpop.f32.mrf.mxu0
        %v912 = vadd.f32 %v583, %v911
        %913 = vmatprep.mubr.bf16.mxu0 0
        %914 = vmatmul.mubr.bf16.gmra.mxu0 %v750
        %v915 = vpop.f32.mrf.mxu0
        %v916 = vadd.f32 %v588, %v915
        %v917 = vpop.f32.mrf.mxu0
        %v918 = vadd.f32 %v588, %v917
        %v919 = vpop.f32.mrf.mxu0
        %v920 = vadd.f32 %v593, %v919
        %v921 = vpop.f32.mrf.mxu0
        %v922 = vadd.f32 %v593, %v921
        %923 = vmatprep.mubr.bf16.mxu0 0
        %924 = vmatmul.mubr.bf16.gmra.mxu0 %v753
        %v925 = vpop.f32.mrf.mxu0
        %v926 = vadd.f32 %v598, %v925
        %v927 = vpop.f32.mrf.mxu0
        %v928 = vadd.f32 %v598, %v927
        %v929 = vpop.f32.mrf.mxu0
        %v930 = vadd.f32 %v603, %v929
        %v931 = vpop.f32.mrf.mxu0
        %v932 = vadd.f32 %v603, %v931
        %933 = vmatprep.mubr.bf16.mxu0 0
        %934 = vmatmul.mubr.bf16.gmra.mxu0 %v756
        %v935 = vpop.f32.mrf.mxu0
        %v936 = vadd.f32 %v608, %v935
        %v937 = vpop.f32.mrf.mxu0
        %v938 = vadd.f32 %v608, %v937
        %v939 = vpop.f32.mrf.mxu0
        %v940 = vadd.f32 %v613, %v939
        %v941 = vpop.f32.mrf.mxu0
        %v942 = vadd.f32 %v613, %v941
        %943 = vmatprep.mubr.bf16.mxu0 0
        %944 = vmatmul.mubr.bf16.gmra.mxu0 %v759
        %v945 = vpop.f32.mrf.mxu0
        %v946 = vadd.f32 %v618, %v945
        %v947 = vpop.f32.mrf.mxu0
        %v948 = vadd.f32 %v618, %v947
        %v949 = vpop.f32.mrf.mxu0
        %v950 = vadd.f32 %v623, %v949
        %v951 = vpop.f32.mrf.mxu0
        %v952 = vadd.f32 %v623, %v951
        %953 = vmatprep.mubr.bf16.mxu0 0
        %954 = vmatmul.mubr.bf16.gmra.mxu0 %v762
        %v955 = vpop.f32.mrf.mxu0
        %v956 = vadd.f32 %v628, %v955
        %v957 = vpop.f32.mrf.mxu0
        %v958 = vadd.f32 %v628, %v957
        %v959 = vpop.f32.mrf.mxu0
        %v960 = vadd.f32 %v633, %v959
        %v961 = vpop.f32.mrf.mxu0
        %v962 = vadd.f32 %v633, %v961
        %963 = vdwg.mxu0
        %v964 = vmax.f32 %v806, 0.0
        %v965 = vmax.f32 %v808, 0.0
        %v966 = vmax.f32 %v810, 0.0
        %v967 = vmax.f32 %v812, 0.0
        %v968 = vmax.f32 %v816, 0.0
        %v969 = vmax.f32 %v818, 0.0
        %v970 = vmax.f32 %v820, 0.0
        %v971 = vmax.f32 %v822, 0.0
        %v972 = vmax.f32 %v826, 0.0
        %v973 = vmax.f32 %v828, 0.0
        %v974 = vmax.f32 %v830, 0.0
        %v975 = vmax.f32 %v832, 0.0
        %v976 = vmax.f32 %v836, 0.0
        %v977 = vmax.f32 %v838, 0.0
        %v978 = vmax.f32 %v840, 0.0
        %v979 = vmax.f32 %v842, 0.0
        %v980 = vmax.f32 %v846, 0.0
        %v981 = vmax.f32 %v848, 0.0
        %v982 = vmax.f32 %v850, 0.0
        %v983 = vmax.f32 %v852, 0.0
        %v984 = vmax.f32 %v856, 0.0
        %v985 = vmax.f32 %v858, 0.0
        %v986 = vmax.f32 %v860, 0.0
        %v987 = vmax.f32 %v862, 0.0
        %v988 = vmax.f32 %v866, 0.0
        %v989 = vmax.f32 %v868, 0.0
        %v990 = vmax.f32 %v870, 0.0
        %v991 = vmax.f32 %v872, 0.0
        %v992 = vmax.f32 %v876, 0.0
        %v993 = vmax.f32 %v878, 0.0
        %v994 = vmax.f32 %v880, 0.0
        %v995 = vmax.f32 %v882, 0.0
        %v996 = vmax.f32 %v886, 0.0
        %v997 = vmax.f32 %v888, 0.0
        %v998 = vmax.f32 %v890, 0.0
        %v999 = vmax.f32 %v892, 0.0
        %v1000 = vmax.f32 %v896, 0.0
        %v1001 = vmax.f32 %v898, 0.0
        %v1002 = vmax.f32 %v900, 0.0
        %v1003 = vmax.f32 %v902, 0.0
        %v1004 = vmax.f32 %v906, 0.0
        %v1005 = vmax.f32 %v908, 0.0
        %v1006 = vmax.f32 %v910, 0.0
        %v1007 = vmax.f32 %v912, 0.0
        %v1008 = vmax.f32 %v916, 0.0
        %v1009 = vmax.f32 %v918, 0.0
        %v1010 = vmax.f32 %v920, 0.0
        %v1011 = vmax.f32 %v922, 0.0
        %v1012 = vmax.f32 %v926, 0.0
        %v1013 = vmax.f32 %v928, 0.0
        %v1014 = vmax.f32 %v930, 0.0
        %v1015 = vmax.f32 %v932, 0.0
        %v1016 = vmax.f32 %v936, 0.0
        %v1017 = vmax.f32 %v938, 0.0
        %v1018 = vmax.f32 %v940, 0.0
        %v1019 = vmax.f32 %v942, 0.0
        %v1020 = vmax.f32 %v946, 0.0
        %v1021 = vmax.f32 %v948, 0.0
        %v1022 = vmax.f32 %v950, 0.0
        %v1023 = vmax.f32 %v952, 0.0
        %v1024 = vmax.f32 %v956, 0.0
        %v1025 = vmax.f32 %v958, 0.0
        %v1026 = vmax.f32 %v960, 0.0
        %v1027 = vmax.f32 %v962, 0.0
        %v1028 = vpack.c.bf16 %v966, %v964
        %v1029 = vpack.c.bf16 %v967, %v965
        %v1030 = vpack.c.bf16 %v970, %v968
        %v1031 = vpack.c.bf16 %v971, %v969
        %v1032 = vpack.c.bf16 %v974, %v972
        %v1033 = vpack.c.bf16 %v975, %v973
        %v1034 = vpack.c.bf16 %v978, %v976
        %v1035 = vpack.c.bf16 %v979, %v977
        %v1036 = vpack.c.bf16 %v982, %v980
        %v1037 = vpack.c.bf16 %v983, %v981
        %v1038 = vpack.c.bf16 %v986, %v984
        %v1039 = vpack.c.bf16 %v987, %v985
        %v1040 = vpack.c.bf16 %v990, %v988
        %v1041 = vpack.c.bf16 %v991, %v989
        %v1042 = vpack.c.bf16 %v994, %v992
        %v1043 = vpack.c.bf16 %v995, %v993
        %v1044 = vpack.c.bf16 %v998, %v996
        %v1045 = vpack.c.bf16 %v999, %v997
        %v1046 = vpack.c.bf16 %v1002, %v1000
        %v1047 = vpack.c.bf16 %v1003, %v1001
        %v1048 = vpack.c.bf16 %v1006, %v1004
        %v1049 = vpack.c.bf16 %v1007, %v1005
        %v1050 = vpack.c.bf16 %v1010, %v1008
        %v1051 = vpack.c.bf16 %v1011, %v1009
        %v1052 = vpack.c.bf16 %v1014, %v1012
        %v1053 = vpack.c.bf16 %v1015, %v1013
        %v1054 = vpack.c.bf16 %v1018, %v1016
        %v1055 = vpack.c.bf16 %v1019, %v1017
        %v1056 = vpack.c.bf16 %v1022, %v1020
        %v1057 = vpack.c.bf16 %v1023, %v1021
        %v1058 = vpack.c.bf16 %v1026, %v1024
        %v1059 = vpack.c.bf16 %v1027, %v1025
        %1061 = vset.pattern.permute.xlu0 0
        %1062 = vperm.xlu0 %1061, %v407
        %v1063 = vpop.permute.xlu0 %1062
        %1066 = vset.pattern.permute.xlu0 0
        %1067 = vperm.xlu0 %1066, %v408
        %v1068 = vpop.permute.xlu0 %1067
        %1071 = vset.pattern.permute.xlu0 0
        %1072 = vperm.xlu0 %1071, %v409
        %v1073 = vpop.permute.xlu0 %1072
        %1076 = vset.pattern.permute.xlu0 0
        %1077 = vperm.xlu0 %1076, %v410
        %v1078 = vpop.permute.xlu0 %1077
        %1081 = vset.pattern.permute.xlu0 0
        %1082 = vperm.xlu0 %1081, %v411
        %v1083 = vpop.permute.xlu0 %1082
        %1086 = vset.pattern.permute.xlu0 0
        %1087 = vperm.xlu0 %1086, %v412
        %v1088 = vpop.permute.xlu0 %1087
        %1091 = vset.pattern.permute.xlu0 0
        %1092 = vperm.xlu0 %1091, %v413
        %v1093 = vpop.permute.xlu0 %1092
        %1096 = vset.pattern.permute.xlu0 0
        %1097 = vperm.xlu0 %1096, %v414
        %v1098 = vpop.permute.xlu0 %1097
        %1101 = vset.pattern.permute.xlu0 0
        %1102 = vperm.xlu0 %1101, %v415
        %v1103 = vpop.permute.xlu0 %1102
        %1106 = vset.pattern.permute.xlu0 0
        %1107 = vperm.xlu0 %1106, %v416
        %v1108 = vpop.permute.xlu0 %1107
        %1111 = vset.pattern.permute.xlu0 0
        %1112 = vperm.xlu0 %1111, %v417
        %v1113 = vpop.permute.xlu0 %1112
        %1116 = vset.pattern.permute.xlu0 0
        %1117 = vperm.xlu0 %1116, %v418
        %v1118 = vpop.permute.xlu0 %1117
        %1121 = vset.pattern.permute.xlu0 0
        %1122 = vperm.xlu0 %1121, %v419
        %v1123 = vpop.permute.xlu0 %1122
        %1126 = vset.pattern.permute.xlu0 0
        %1127 = vperm.xlu0 %1126, %v420
        %v1128 = vpop.permute.xlu0 %1127
        %1131 = vset.pattern.permute.xlu0 0
        %1132 = vperm.xlu0 %1131, %v421
        %v1133 = vpop.permute.xlu0 %1132
        %1136 = vset.pattern.permute.xlu0 0
        %1137 = vperm.xlu0 %1136, %v422
        %v1138 = vpop.permute.xlu0 %1137
        %1141 = vset.pattern.permute.xlu0 0
        %1142 = vperm.xlu0 %1141, %v423
        %v1143 = vpop.permute.xlu0 %1142
        %1146 = vset.pattern.permute.xlu0 0
        %1147 = vperm.xlu0 %1146, %v424
        %v1148 = vpop.permute.xlu0 %1147
        %1151 = vset.pattern.permute.xlu0 0
        %1152 = vperm.xlu0 %1151, %v425
        %v1153 = vpop.permute.xlu0 %1152
        %1156 = vset.pattern.permute.xlu0 0
        %1157 = vperm.xlu0 %1156, %v426
        %v1158 = vpop.permute.xlu0 %1157
        %1161 = vset.pattern.permute.xlu0 0
        %1162 = vperm.xlu0 %1161, %v427
        %v1163 = vpop.permute.xlu0 %1162
        %1166 = vset.pattern.permute.xlu0 0
        %1167 = vperm.xlu0 %1166, %v428
        %v1168 = vpop.permute.xlu0 %1167
        %1171 = vset.pattern.permute.xlu0 0
        %1172 = vperm.xlu0 %1171, %v429
        %v1173 = vpop.permute.xlu0 %1172
        %1176 = vset.pattern.permute.xlu0 0
        %1177 = vperm.xlu0 %1176, %v430
        %v1178 = vpop.permute.xlu0 %1177
        %1181 = vset.pattern.permute.xlu0 0
        %1182 = vperm.xlu0 %1181, %v431
        %v1183 = vpop.permute.xlu0 %1182
        %1186 = vset.pattern.permute.xlu0 0
        %1187 = vperm.xlu0 %1186, %v432
        %v1188 = vpop.permute.xlu0 %1187
        %1191 = vset.pattern.permute.xlu0 0
        %1192 = vperm.xlu0 %1191, %v433
        %v1193 = vpop.permute.xlu0 %1192
        %1196 = vset.pattern.permute.xlu0 0
        %1197 = vperm.xlu0 %1196, %v434
        %v1198 = vpop.permute.xlu0 %1197
        %1201 = vset.pattern.permute.xlu0 0
        %1202 = vperm.xlu0 %1201, %v435
        %v1203 = vpop.permute.xlu0 %1202
        %1206 = vset.pattern.permute.xlu0 0
        %1207 = vperm.xlu0 %1206, %v436
        %v1208 = vpop.permute.xlu0 %1207
        %1211 = vset.pattern.permute.xlu0 0
        %1212 = vperm.xlu0 %1211, %v437
        %v1213 = vpop.permute.xlu0 %1212
        %1216 = vset.pattern.permute.xlu0 0
        %1217 = vperm.xlu0 %1216, %v438
        %v1218 = vpop.permute.xlu0 %1217
        %v1252 = vunpack.c.l.b16 %v375
        %v1253 = vunpack.c.h.b16 %v375
        %v1254 = vunpack.c.l.b16 %v376
        %v1255 = vunpack.c.h.b16 %v376
        %v1256 = vunpack.c.l.b16 %v377
        %v1257 = vunpack.c.h.b16 %v377
        %v1258 = vunpack.c.l.b16 %v378
        %v1259 = vunpack.c.h.b16 %v378
        %v1260 = vunpack.c.l.b16 %v379
        %v1261 = vunpack.c.h.b16 %v379
        %v1262 = vunpack.c.l.b16 %v380
        %v1263 = vunpack.c.h.b16 %v380
        %v1264 = vunpack.c.l.b16 %v381
        %v1265 = vunpack.c.h.b16 %v381
        %v1266 = vunpack.c.l.b16 %v382
        %v1267 = vunpack.c.h.b16 %v382
        %v1268 = vunpack.c.l.b16 %v383
        %v1269 = vunpack.c.h.b16 %v383
        %v1270 = vunpack.c.l.b16 %v384
        %v1271 = vunpack.c.h.b16 %v384
        %v1272 = vunpack.c.l.b16 %v385
        %v1273 = vunpack.c.h.b16 %v385
        %v1274 = vunpack.c.l.b16 %v386
        %v1275 = vunpack.c.h.b16 %v386
        %v1276 = vunpack.c.l.b16 %v387
        %v1277 = vunpack.c.h.b16 %v387
        %v1278 = vunpack.c.l.b16 %v388
        %v1279 = vunpack.c.h.b16 %v388
        %v1280 = vunpack.c.l.b16 %v389
        %v1281 = vunpack.c.h.b16 %v389
        %v1282 = vunpack.c.l.b16 %v390
        %v1283 = vunpack.c.h.b16 %v390
        %v1284 = vunpack.c.l.b16 %v391
        %v1285 = vunpack.c.h.b16 %v391
        %v1286 = vunpack.c.l.b16 %v392
        %v1287 = vunpack.c.h.b16 %v392
        %v1288 = vunpack.c.l.b16 %v393
        %v1289 = vunpack.c.h.b16 %v393
        %v1290 = vunpack.c.l.b16 %v394
        %v1291 = vunpack.c.h.b16 %v394
        %v1292 = vunpack.c.l.b16 %v395
        %v1293 = vunpack.c.h.b16 %v395
        %v1294 = vunpack.c.l.b16 %v396
        %v1295 = vunpack.c.h.b16 %v396
        %v1296 = vunpack.c.l.b16 %v397
        %v1297 = vunpack.c.h.b16 %v397
        %v1298 = vunpack.c.l.b16 %v398
        %v1299 = vunpack.c.h.b16 %v398
        %v1300 = vunpack.c.l.b16 %v399
        %v1301 = vunpack.c.h.b16 %v399
        %v1302 = vunpack.c.l.b16 %v400
        %v1303 = vunpack.c.h.b16 %v400
        %v1304 = vunpack.c.l.b16 %v401
        %v1305 = vunpack.c.h.b16 %v401
        %v1306 = vunpack.c.l.b16 %v402
        %v1307 = vunpack.c.h.b16 %v402
        %v1308 = vunpack.c.l.b16 %v403
        %v1309 = vunpack.c.h.b16 %v403
        %v1310 = vunpack.c.l.b16 %v404
        %v1311 = vunpack.c.h.b16 %v404
        %v1312 = vunpack.c.l.b16 %v405
        %v1313 = vunpack.c.h.b16 %v405
        %v1314 = vunpack.c.l.b16 %v406
        %v1315 = vunpack.c.h.b16 %v406
        %v1316 = vpack.c.b16 %v1254, %v1252
        %v1317 = vpack.c.b16 %v1255, %v1253
        %v1318 = vpack.c.b16 %v1258, %v1256
        %v1319 = vpack.c.b16 %v1259, %v1257
        %v1320 = vpack.c.b16 %v1262, %v1260
        %v1321 = vpack.c.b16 %v1263, %v1261
        %v1322 = vpack.c.b16 %v1266, %v1264
        %v1323 = vpack.c.b16 %v1267, %v1265
        %v1324 = vpack.c.b16 %v1270, %v1268
        %v1325 = vpack.c.b16 %v1271, %v1269
        %v1326 = vpack.c.b16 %v1274, %v1272
        %v1327 = vpack.c.b16 %v1275, %v1273
        %v1328 = vpack.c.b16 %v1278, %v1276
        %v1329 = vpack.c.b16 %v1279, %v1277
        %v1330 = vpack.c.b16 %v1282, %v1280
        %v1331 = vpack.c.b16 %v1283, %v1281
        %v1332 = vpack.c.b16 %v1286, %v1284
        %v1333 = vpack.c.b16 %v1287, %v1285
        %v1334 = vpack.c.b16 %v1290, %v1288
        %v1335 = vpack.c.b16 %v1291, %v1289
        %v1336 = vpack.c.b16 %v1294, %v1292
        %v1337 = vpack.c.b16 %v1295, %v1293
        %v1338 = vpack.c.b16 %v1298, %v1296
        %v1339 = vpack.c.b16 %v1299, %v1297
        %v1340 = vpack.c.b16 %v1302, %v1300
        %v1341 = vpack.c.b16 %v1303, %v1301
        %v1342 = vpack.c.b16 %v1306, %v1304
        %v1343 = vpack.c.b16 %v1307, %v1305
        %v1344 = vpack.c.b16 %v1310, %v1308
        %v1345 = vpack.c.b16 %v1311, %v1309
        %v1346 = vpack.c.b16 %v1314, %v1312
        %v1347 = vpack.c.b16 %v1315, %v1313
        %1380 = vmatprep.subr.bf16.mxu0 %v1043
        %1381 = vmatpush1.bf16.msra.mxu0 %v1042
        %1382 = vmatprep.subr.bf16.mxu0 %v1041
        %1383 = vmatpush1.bf16.msra.mxu0 %v1040
        %1384 = vmatprep.subr.bf16.mxu0 %v1039
        %1385 = vmatpush1.bf16.msra.mxu0 %v1038
        %1386 = vmatprep.subr.bf16.mxu0 %v1037
        %1387 = vmatpush1.bf16.msra.mxu0 %v1036
        %1388 = vmatprep.subr.bf16.mxu0 %v1035
        %1389 = vmatpush1.bf16.msra.mxu0 %v1034
        %1390 = vmatprep.subr.bf16.mxu0 %v1033
        %1391 = vmatpush1.bf16.msra.mxu0 %v1032
        %1392 = vmatprep.subr.bf16.mxu0 %v1031
        %1393 = vmatpush1.bf16.msra.mxu0 %v1030
        %1394 = vmatprep.subr.bf16.mxu0 %v1029
        %1395 = vmatpush1.bf16.msra.mxu0 %v1028
        %1396 = vmatprep.subr.bf16.mxu0 %v1059
        %1397 = vmatpush2.bf16.msra.mxu0 %v1058
        %1398 = vmatprep.subr.bf16.mxu0 %v1057
        %1399 = vmatpush2.bf16.msra.mxu0 %v1056
        %1400 = vmatprep.subr.bf16.mxu0 %v1055
        %1401 = vmatpush2.bf16.msra.mxu0 %v1054
        %1402 = vmatprep.subr.bf16.mxu0 %v1053
        %1403 = vmatpush2.bf16.msra.mxu0 %v1052
        %1404 = vmatprep.subr.bf16.mxu0 %v1051
        %1405 = vmatpush2.bf16.msra.mxu0 %v1050
        %1406 = vmatprep.subr.bf16.mxu0 %v1049
        %1407 = vmatpush2.bf16.msra.mxu0 %v1048
        %1408 = vmatprep.subr.bf16.mxu0 %v1047
        %1409 = vmatpush2.bf16.msra.mxu0 %v1046
        %1410 = vmatprep.subr.bf16.mxu0 %v1045
        %1411 = vmatpush2.bf16.msra.mxu0 %v1044
        %1412 = vmatprep.mubr.bf16.mxu0 %v1317
        %1413 = vmatmul.mubr.bf16.gmra.mxu0 %v1316
        %v1414 = vpop.f32.mrf.mxu0
        %v1415 = vadd.f32 %v1063, %v1414
        %v1416 = vpop.f32.mrf.mxu0
        %v1417 = vadd.f32 %v1063, %v1416
        %v1418 = vpop.f32.mrf.mxu0
        %v1419 = vadd.f32 %v1068, %v1418
        %v1420 = vpop.f32.mrf.mxu0
        %v1421 = vadd.f32 %v1068, %v1420
        %1422 = vmatprep.mubr.bf16.mxu0 %v1319
        %1423 = vmatmul.mubr.bf16.gmra.mxu0 %v1318
        %v1424 = vpop.f32.mrf.mxu0
        %v1425 = vadd.f32 %v1073, %v1424
        %v1426 = vpop.f32.mrf.mxu0
        %v1427 = vadd.f32 %v1073, %v1426
        %v1428 = vpop.f32.mrf.mxu0
        %v1429 = vadd.f32 %v1078, %v1428
        %v1430 = vpop.f32.mrf.mxu0
        %v1431 = vadd.f32 %v1078, %v1430
        %1432 = vmatprep.mubr.bf16.mxu0 %v1321
        %1433 = vmatmul.mubr.bf16.gmra.mxu0 %v1320
        %v1434 = vpop.f32.mrf.mxu0
        %v1435 = vadd.f32 %v1083, %v1434
        %v1436 = vpop.f32.mrf.mxu0
        %v1437 = vadd.f32 %v1083, %v1436
        %v1438 = vpop.f32.mrf.mxu0
        %v1439 = vadd.f32 %v1088, %v1438
        %v1440 = vpop.f32.mrf.mxu0
        %v1441 = vadd.f32 %v1088, %v1440
        %1442 = vmatprep.mubr.bf16.mxu0 %v1323
        %1443 = vmatmul.mubr.bf16.gmra.mxu0 %v1322
        %v1444 = vpop.f32.mrf.mxu0
        %v1445 = vadd.f32 %v1093, %v1444
        %v1446 = vpop.f32.mrf.mxu0
        %v1447 = vadd.f32 %v1093, %v1446
        %v1448 = vpop.f32.mrf.mxu0
        %v1449 = vadd.f32 %v1098, %v1448
        %v1450 = vpop.f32.mrf.mxu0
        %v1451 = vadd.f32 %v1098, %v1450
        %1452 = vmatprep.mubr.bf16.mxu0 %v1325
        %1453 = vmatmul.mubr.bf16.gmra.mxu0 %v1324
        %v1454 = vpop.f32.mrf.mxu0
        %v1455 = vadd.f32 %v1103, %v1454
        %v1456 = vpop.f32.mrf.mxu0
        %v1457 = vadd.f32 %v1103, %v1456
        %v1458 = vpop.f32.mrf.mxu0
        %v1459 = vadd.f32 %v1108, %v1458
        %v1460 = vpop.f32.mrf.mxu0
        %v1461 = vadd.f32 %v1108, %v1460
        %1462 = vmatprep.mubr.bf16.mxu0 %v1327
        %1463 = vmatmul.mubr.bf16.gmra.mxu0 %v1326
        %v1464 = vpop.f32.mrf.mxu0
        %v1465 = vadd.f32 %v1113, %v1464
        %v1466 = vpop.f32.mrf.mxu0
        %v1467 = vadd.f32 %v1113, %v1466
        %v1468 = vpop.f32.mrf.mxu0
        %v1469 = vadd.f32 %v1118, %v1468
        %v1470 = vpop.f32.mrf.mxu0
        %v1471 = vadd.f32 %v1118, %v1470
        %1472 = vmatprep.mubr.bf16.mxu0 %v1329
        %1473 = vmatmul.mubr.bf16.gmra.mxu0 %v1328
        %v1474 = vpop.f32.mrf.mxu0
        %v1475 = vadd.f32 %v1123, %v1474
        %v1476 = vpop.f32.mrf.mxu0
        %v1477 = vadd.f32 %v1123, %v1476
        %v1478 = vpop.f32.mrf.mxu0
        %v1479 = vadd.f32 %v1128, %v1478
        %v1480 = vpop.f32.mrf.mxu0
        %v1481 = vadd.f32 %v1128, %v1480
        %1482 = vmatprep.mubr.bf16.mxu0 %v1331
        %1483 = vmatmul.mubr.bf16.gmra.mxu0 %v1330
        %v1484 = vpop.f32.mrf.mxu0
        %v1485 = vadd.f32 %v1133, %v1484
        %v1486 = vpop.f32.mrf.mxu0
        %v1487 = vadd.f32 %v1133, %v1486
        %v1488 = vpop.f32.mrf.mxu0
        %v1489 = vadd.f32 %v1138, %v1488
        %v1490 = vpop.f32.mrf.mxu0
        %v1491 = vadd.f32 %v1138, %v1490
        %1492 = vmatprep.mubr.bf16.mxu0 %v1333
        %1493 = vmatmul.mubr.bf16.gmra.mxu0 %v1332
        %v1494 = vpop.f32.mrf.mxu0
        %v1495 = vadd.f32 %v1143, %v1494
        %v1496 = vpop.f32.mrf.mxu0
        %v1497 = vadd.f32 %v1143, %v1496
        %v1498 = vpop.f32.mrf.mxu0
        %v1499 = vadd.f32 %v1148, %v1498
        %v1500 = vpop.f32.mrf.mxu0
        %v1501 = vadd.f32 %v1148, %v1500
        %1502 = vmatprep.mubr.bf16.mxu0 %v1335
        %1503 = vmatmul.mubr.bf16.gmra.mxu0 %v1334
        %v1504 = vpop.f32.mrf.mxu0
        %v1505 = vadd.f32 %v1153, %v1504
        %v1506 = vpop.f32.mrf.mxu0
        %v1507 = vadd.f32 %v1153, %v1506
        %v1508 = vpop.f32.mrf.mxu0
        %v1509 = vadd.f32 %v1158, %v1508
        %v1510 = vpop.f32.mrf.mxu0
        %v1511 = vadd.f32 %v1158, %v1510
        %1512 = vmatprep.mubr.bf16.mxu0 %v1337
        %1513 = vmatmul.mubr.bf16.gmra.mxu0 %v1336
        %v1514 = vpop.f32.mrf.mxu0
        %v1515 = vadd.f32 %v1163, %v1514
        %v1516 = vpop.f32.mrf.mxu0
        %v1517 = vadd.f32 %v1163, %v1516
        %v1518 = vpop.f32.mrf.mxu0
        %v1519 = vadd.f32 %v1168, %v1518
        %v1520 = vpop.f32.mrf.mxu0
        %v1521 = vadd.f32 %v1168, %v1520
        %1522 = vmatprep.mubr.bf16.mxu0 %v1339
        %1523 = vmatmul.mubr.bf16.gmra.mxu0 %v1338
        %v1524 = vpop.f32.mrf.mxu0
        %v1525 = vadd.f32 %v1173, %v1524
        %v1526 = vpop.f32.mrf.mxu0
        %v1527 = vadd.f32 %v1173, %v1526
        %v1528 = vpop.f32.mrf.mxu0
        %v1529 = vadd.f32 %v1178, %v1528
        %v1530 = vpop.f32.mrf.mxu0
        %v1531 = vadd.f32 %v1178, %v1530
        %1532 = vmatprep.mubr.bf16.mxu0 %v1341
        %1533 = vmatmul.mubr.bf16.gmra.mxu0 %v1340
        %v1534 = vpop.f32.mrf.mxu0
        %v1535 = vadd.f32 %v1183, %v1534
        %v1536 = vpop.f32.mrf.mxu0
        %v1537 = vadd.f32 %v1183, %v1536
        %v1538 = vpop.f32.mrf.mxu0
        %v1539 = vadd.f32 %v1188, %v1538
        %v1540 = vpop.f32.mrf.mxu0
        %v1541 = vadd.f32 %v1188, %v1540
        %1542 = vmatprep.mubr.bf16.mxu0 %v1343
        %1543 = vmatmul.mubr.bf16.gmra.mxu0 %v1342
        %v1544 = vpop.f32.mrf.mxu0
        %v1545 = vadd.f32 %v1193, %v1544
        %v1546 = vpop.f32.mrf.mxu0
        %v1547 = vadd.f32 %v1193, %v1546
        %v1548 = vpop.f32.mrf.mxu0
        %v1549 = vadd.f32 %v1198, %v1548
        %v1550 = vpop.f32.mrf.mxu0
        %v1551 = vadd.f32 %v1198, %v1550
        %1552 = vmatprep.mubr.bf16.mxu0 %v1345
        %1553 = vmatmul.mubr.bf16.gmra.mxu0 %v1344
        %v1554 = vpop.f32.mrf.mxu0
        %v1555 = vadd.f32 %v1203, %v1554
        %v1556 = vpop.f32.mrf.mxu0
        %v1557 = vadd.f32 %v1203, %v1556
        %v1558 = vpop.f32.mrf.mxu0
        %v1559 = vadd.f32 %v1208, %v1558
        %v1560 = vpop.f32.mrf.mxu0
        %v1561 = vadd.f32 %v1208, %v1560
        %1562 = vmatprep.mubr.bf16.mxu0 %v1347
        %1563 = vmatmul.mubr.bf16.gmra.mxu0 %v1346
        %v1564 = vpop.f32.mrf.mxu0
        %v1565 = vadd.f32 %v1213, %v1564
        %v1566 = vpop.f32.mrf.mxu0
        %v1567 = vadd.f32 %v1213, %v1566
        %v1568 = vpop.f32.mrf.mxu0
        %v1569 = vadd.f32 %v1218, %v1568
        %v1570 = vpop.f32.mrf.mxu0
        %v1571 = vadd.f32 %v1218, %v1570
        %1572 = vdwg.mxu0
        %v1573 = vmax.f32 %v1415, 0.0
        %v1574 = vmax.f32 %v1417, 0.0
        %v1575 = vmax.f32 %v1419, 0.0
        %v1576 = vmax.f32 %v1421, 0.0
        %v1577 = vmax.f32 %v1425, 0.0
        %v1578 = vmax.f32 %v1427, 0.0
        %v1579 = vmax.f32 %v1429, 0.0
        %v1580 = vmax.f32 %v1431, 0.0
        %v1581 = vmax.f32 %v1435, 0.0
        %v1582 = vmax.f32 %v1437, 0.0
        %v1583 = vmax.f32 %v1439, 0.0
        %v1584 = vmax.f32 %v1441, 0.0
        %v1585 = vmax.f32 %v1445, 0.0
        %v1586 = vmax.f32 %v1447, 0.0
        %v1587 = vmax.f32 %v1449, 0.0
        %v1588 = vmax.f32 %v1451, 0.0
        %v1589 = vmax.f32 %v1455, 0.0
        %v1590 = vmax.f32 %v1457, 0.0
        %v1591 = vmax.f32 %v1459, 0.0
        %v1592 = vmax.f32 %v1461, 0.0
        %v1593 = vmax.f32 %v1465, 0.0
        %v1594 = vmax.f32 %v1467, 0.0
        %v1595 = vmax.f32 %v1469, 0.0
        %v1596 = vmax.f32 %v1471, 0.0
        %v1597 = vmax.f32 %v1475, 0.0
        %v1598 = vmax.f32 %v1477, 0.0
        %v1599 = vmax.f32 %v1479, 0.0
        %v1600 = vmax.f32 %v1481, 0.0
        %v1601 = vmax.f32 %v1485, 0.0
        %v1602 = vmax.f32 %v1487, 0.0
        %v1603 = vmax.f32 %v1489, 0.0
        %v1604 = vmax.f32 %v1491, 0.0
        %v1605 = vmax.f32 %v1495, 0.0
        %v1606 = vmax.f32 %v1497, 0.0
        %v1607 = vmax.f32 %v1499, 0.0
        %v1608 = vmax.f32 %v1501, 0.0
        %v1609 = vmax.f32 %v1505, 0.0
        %v1610 = vmax.f32 %v1507, 0.0
        %v1611 = vmax.f32 %v1509, 0.0
        %v1612 = vmax.f32 %v1511, 0.0
        %v1613 = vmax.f32 %v1515, 0.0
        %v1614 = vmax.f32 %v1517, 0.0
        %v1615 = vmax.f32 %v1519, 0.0
        %v1616 = vmax.f32 %v1521, 0.0
        %v1617 = vmax.f32 %v1525, 0.0
        %v1618 = vmax.f32 %v1527, 0.0
        %v1619 = vmax.f32 %v1529, 0.0
        %v1620 = vmax.f32 %v1531, 0.0
        %v1621 = vmax.f32 %v1535, 0.0
        %v1622 = vmax.f32 %v1537, 0.0
        %v1623 = vmax.f32 %v1539, 0.0
        %v1624 = vmax.f32 %v1541, 0.0
        %v1625 = vmax.f32 %v1545, 0.0
        %v1626 = vmax.f32 %v1547, 0.0
        %v1627 = vmax.f32 %v1549, 0.0
        %v1628 = vmax.f32 %v1551, 0.0
        %v1629 = vmax.f32 %v1555, 0.0
        %v1630 = vmax.f32 %v1557, 0.0
        %v1631 = vmax.f32 %v1559, 0.0
        %v1632 = vmax.f32 %v1561, 0.0
        %v1633 = vmax.f32 %v1565, 0.0
        %v1634 = vmax.f32 %v1567, 0.0
        %v1635 = vmax.f32 %v1569, 0.0
        %v1636 = vmax.f32 %v1571, 0.0
        %v1637 = vpack.c.bf16 %v1575, %v1573
        %v1638 = vpack.c.bf16 %v1576, %v1574
        %v1639 = vpack.c.bf16 %v1579, %v1577
        %v1640 = vpack.c.bf16 %v1580, %v1578
        %v1641 = vpack.c.bf16 %v1583, %v1581
        %v1642 = vpack.c.bf16 %v1584, %v1582
        %v1643 = vpack.c.bf16 %v1587, %v1585
        %v1644 = vpack.c.bf16 %v1588, %v1586
        %v1645 = vpack.c.bf16 %v1591, %v1589
        %v1646 = vpack.c.bf16 %v1592, %v1590
        %v1647 = vpack.c.bf16 %v1595, %v1593
        %v1648 = vpack.c.bf16 %v1596, %v1594
        %v1649 = vpack.c.bf16 %v1599, %v1597
        %v1650 = vpack.c.bf16 %v1600, %v1598
        %v1651 = vpack.c.bf16 %v1603, %v1601
        %v1652 = vpack.c.bf16 %v1604, %v1602
        %v1653 = vpack.c.bf16 %v1607, %v1605
        %v1654 = vpack.c.bf16 %v1608, %v1606
        %v1655 = vpack.c.bf16 %v1611, %v1609
        %v1656 = vpack.c.bf16 %v1612, %v1610
        %v1657 = vpack.c.bf16 %v1615, %v1613
        %v1658 = vpack.c.bf16 %v1616, %v1614
        %v1659 = vpack.c.bf16 %v1619, %v1617
        %v1660 = vpack.c.bf16 %v1620, %v1618
        %v1661 = vpack.c.bf16 %v1623, %v1621
        %v1662 = vpack.c.bf16 %v1624, %v1622
        %v1663 = vpack.c.bf16 %v1627, %v1625
        %v1664 = vpack.c.bf16 %v1628, %v1626
        %v1665 = vpack.c.bf16 %v1631, %v1629
        %v1666 = vpack.c.bf16 %v1632, %v1630
        %v1667 = vpack.c.bf16 %v1635, %v1633
        %v1668 = vpack.c.bf16 %v1636, %v1634
        %1670 = vset.pattern.permute.xlu0 0
        %1671 = vperm.xlu0 %1670, %v440
        %v1672 = vpop.permute.xlu0 %1671
        %v1674 = vlaneseq
        %v1675 = vshrl.u32 %v1674, 7
        %v1676 = vsub.s32 0, %v1675
        %v1677 = vrot.slane %v1672, %v1676
        %v1680 = vunpack.c.l.s4 1966171168
        %v1681 = vunpack.c.0.s8 %v1680
        %v1682 = vlaneseq
        %v1683 = vshrl.u32 %v1682, 7
        %v1684 = vsub.s32 %v1681, %v1683
        %v1685 = vrot.slane %v439, %v1684
        %v1686 = vcombine.high %v1685, %v1685
        %v1688 = vunpack.c.l.s4 1966171168
        %v1689 = vunpack.c.0.s8 %v1688
        %v1690 = vlaneseq
        %v1691 = vshrl.u32 %v1690, 7
        %v1692 = vsub.s32 %v1689, %v1691
        %v1693 = vrot.slane %v1685, %v1692
        %v1695 = vunpack.c.l.s4 1966171168
        %v1696 = vunpack.c.0.s8 %v1695
        %v1697 = vlaneseq
        %v1698 = vshrl.u32 %v1697, 7
        %v1699 = vsub.s32 %v1696, %v1698
        %v1700 = vrot.slane %v1686, %v1699
        %1703 = vmatprep.subr.bf16.mxu0 %v1652
        %1704 = vmatpush1.bf16.msra.mxu0 %v1651
        %1705 = vmatprep.subr.bf16.mxu0 %v1650
        %1706 = vmatpush1.bf16.msra.mxu0 %v1649
        %1707 = vmatprep.subr.bf16.mxu0 %v1648
        %1708 = vmatpush1.bf16.msra.mxu0 %v1647
        %1709 = vmatprep.subr.bf16.mxu0 %v1646
        %1710 = vmatpush1.bf16.msra.mxu0 %v1645
        %1711 = vmatprep.subr.bf16.mxu0 %v1644
        %1712 = vmatpush1.bf16.msra.mxu0 %v1643
        %1713 = vmatprep.subr.bf16.mxu0 %v1642
        %1714 = vmatpush1.bf16.msra.mxu0 %v1641
        %1715 = vmatprep.subr.bf16.mxu0 %v1640
        %1716 = vmatpush1.bf16.msra.mxu0 %v1639
        %1717 = vmatprep.subr.bf16.mxu0 %v1638
        %1718 = vmatpush1.bf16.msra.mxu0 %v1637
        %1719 = vmatprep.subr.bf16.mxu0 %v1668
        %1720 = vmatpush2.bf16.msra.mxu0 %v1667
        %1721 = vmatprep.subr.bf16.mxu0 %v1666
        %1722 = vmatpush2.bf16.msra.mxu0 %v1665
        %1723 = vmatprep.subr.bf16.mxu0 %v1664
        %1724 = vmatpush2.bf16.msra.mxu0 %v1663
        %1725 = vmatprep.subr.bf16.mxu0 %v1662
        %1726 = vmatpush2.bf16.msra.mxu0 %v1661
        %1727 = vmatprep.subr.bf16.mxu0 %v1660
        %1728 = vmatpush2.bf16.msra.mxu0 %v1659
        %1729 = vmatprep.subr.bf16.mxu0 %v1658
        %1730 = vmatpush2.bf16.msra.mxu0 %v1657
        %1731 = vmatprep.subr.bf16.mxu0 %v1656
        %1732 = vmatpush2.bf16.msra.mxu0 %v1655
        %1733 = vmatprep.subr.bf16.mxu0 %v1654
        %1734 = vmatpush2.bf16.msra.mxu0 %v1653
        %1735 = vmatprep.mubr.bf16.mxu0 %v1700
        %1736 = vmatmul.mubr.bf16.gmra.mxu0 %v1693
        %v1737 = vpop.f32.mrf.mxu0
        %v1738 = vadd.f32 %v1677, %v1737
        %v1739 = vpop.f32.mrf.mxu0
        %v1740 = vadd.f32 %v1677, %v1739
        %v1741 = vpop.f32.mrf.mxu0
        %v1742 = vpop.f32.mrf.mxu0
        %1743 = vdwg.mxu0
        %v1746 = vcombine.low %v1738, %v1740
        %v1748 = vunpack.c.l.s4 1966171168
        %v1749 = vunpack.c.0.s8 %v1748
        %v1750 = vlaneseq
        %v1751 = vshrl.u32 %v1750, 7
        %v1752 = vsub.s32 %v1749, %v1751
        %v1753 = vrot.slane %v1746, %v1752
        %v1755 = vunpack.c.l.s4 1966171168
        %v1756 = vunpack.c.0.s8 %v1755
        %v1757 = vlaneseq
        %v1758 = vshrl.u32 %v1757, 7
        %v1759 = vsub.s32 %v1756, %v1758
        %v1760 = vrot.slane %v1753, %v1759
        %v1762 = vlaneseq
        %vm1763 = vcmp.ge.s32.totalorder %v1762, 0
        %vm1764 = vcmp.lt.s32.totalorder %v1762, 256
        %vm1765 = vmand %vm1763, %vm1764
        %1766 = vst.msk [vmem:[%s298] sm:$0x3] %vm1765, %v1760
        %s1767 = sand.u32 %s199, 1
        %s1768 = scalar_lea.sflag [#allocation4], %s1767
        %s1769 = sand.u32 %s199, 1
        %s1770 = smul.addr %s1769, 2
        %s1771 = scalar_lea.vmem [#allocation3], %s1770
        // Predicated region
        $region49: #{tpu_custom_call.1} parent=47 // pred_check
          %p1772 = pneg %p209
        $region50: #{tpu_custom_call.1} parent=47 // pred_check_branch
          %1774 = sbr.rel (%p1772) target = $region52
        $region51: #{tpu_custom_call.1} parent=47 // pred_region
          %s1775 = smul.u32 2, %s28
          %s1777 = ssub.s32 32, 32
          %1778 = vsyncadd %s1768, %s1777
          %s1779 = smul.addr %s27, 2
          %s1780 = sadd.s32 %s1775, %s1779
          %s1781 = smul.addr %s1780, 16
          %s1782 = scalar_lea.hbm %s7, %s1781
          %s1784 = sshll.u32 %s1771, 4
          %s1785 = int_to_ptr.vmem [resolvable:$true] %s1784
          %1787 = dma.vmem_to_hbm [thread:$0]  %s1785, 32, %s1782, %s1768
        $region52: #{tpu_custom_call.1} parent=47 // pred_fallthru
          _
      $region48: #{tpu_custom_call.1} parent=5 // pred_fallthru
        _
      %p1788 = scmp.le.s32.totalorder 2, %s18
      // Predicated region
      $region53: #{tpu_custom_call.1} parent=5 // pred_check
        %p1789 = pneg %p1788
      $region54: #{tpu_custom_call.1} parent=5 // pred_check_branch
        %1791 = sbr.rel (%p1789) target = $region56
      $region55: #{tpu_custom_call.1} parent=5 // pred_region
        %s1792 = ssub.s32 %s18, 2
        // Predicated region
        $region57: #{tpu_custom_call.1} parent=55 // pred_check
          %p1793 = pneg %p215
        $region58: #{tpu_custom_call.1} parent=55 // pred_check_branch
          %1795 = sbr.rel (%p1793) target = $region60
        $region59: #{tpu_custom_call.1} parent=55 // pred_region
          %s1796 = sand.u32 %s200, 1
          %s1797 = scalar_lea.sflag [#allocation4], %s1796
          %s1798 = sand.u32 %s200, 1
          %s1799 = smul.addr %s1798, 2
          %s1800 = scalar_lea.vmem [#allocation3], %s1799
          %1801 = dma.done %s1797, 32
        $region60: #{tpu_custom_call.1} parent=55 // pred_fallthru
          _
      $region56: #{tpu_custom_call.1} parent=5 // pred_fallthru
        _
    $region6: #{tpu_custom_call.1} parent=1 // loop_footer
      %s22 = sadd.s32 1, %s18
    $region7: #{tpu_custom_call.1} parent=1 // loop_footer_branch
      %17 = sbr.rel target = $region3
    $region8: #{tpu_custom_call.1} parent=1 // loop_exit
      _
    %1802 = vsyncpa [#allocation4], 1
    %s1803 = scalar_lea.sflag [#allocation4], 1
    %1804 = vsyncpa %s1803, 1

</llo_original>
